<compile_context>
chip_gen: v5e
topology: v5e:2x2
jax: 0.10.0
libtpu: 0.0.40
codegen_flags: <defaults>
</compile_context>

<pallas_src>
import math

import jax
import jax.numpy as jnp
from jax.experimental import pallas as pl
from jax.experimental.pallas import tpu as pltpu

_LANE = 128
# TODO(synk): on v6e/v7x (256-wide MXU) pad feature dims to 256 when real dims
#             are >= 128; at these demo sizes (8-32) that is only padding waste.
VMEM_SPEC = pl.BlockSpec(memory_space=pltpu.MemorySpace.VMEM)


def _round_up(v, m):
    return ((v + m - 1) // m) * m


def _pad2d(a, rows, cols):
    r, c = a.shape
    return jnp.pad(a, ((0, rows - r), (0, cols - c)))


def _vmem_capacity_bytes():
    try:
        return int(pltpu.get_tpu_info().vmem_capacity_bytes)
    except Exception:
        return 64 * 1024 * 1024  # conservative fallback (v7x per-TC VMEM)


# ---------------------------------------------------------------------------
# Fully VMEM-resident fused kernel (small/medium graphs): A (bf16), all weights,
# d_inv_sqrt and every intermediate stay in VMEM across all layers.
# ---------------------------------------------------------------------------
def make_fused_resident_kernel(n_real, layer_in_dims, num_layers, has_residual):
    """layer_in_dims[i] = real (unpadded) input feature count of GCN layer i."""

    def kernel(x_ref, adj_ref, dinv_ref, lin_w_ref, lin_b_ref, *rest):
        w_refs = rest[:num_layers]
        o_ref = rest[num_layers]

        n_pad = adj_ref.shape[0]
        row_ids = jax.lax.broadcasted_iota(jnp.int32, (n_pad, 1), 0)
        row_mask = (row_ids < n_real).astype(jnp.float32)

        a_bf16 = adj_ref[...]          # (N_pad, N_pad) bf16, resident for all layers
        d_inv_sqrt = dinv_ref[...]     # (N_pad, 1) f32, precomputed in wrapper

        x_in = x_ref[...]              # f32, exact zeros in padding

        if has_residual:
            # x0 = Linear(x); mask padded rows so the bias never leaks into them.
            x0 = (jnp.dot(x_in.astype(jnp.bfloat16), lin_w_ref[...],
                          preferred_element_type=jnp.float32)
                  + lin_b_ref[...]) * row_mask
        else:
            x0 = None                  # dead when there is a single GCN layer

        h = x_in
        for li in range(num_layers):
            f_real = layer_in_dims[li]
            n_elem = n_real * f_real
            col_ids = jax.lax.broadcasted_iota(jnp.int32, (1, h.shape[1]), 1)
            mask2d = row_mask * (col_ids < f_real).astype(jnp.float32)

            # Two-pass standardization (torch: global scalar mean, unbiased std).
            # Padded entries of h are exact zeros so the sums only see real data;
            # masking (h - mean) keeps padding exactly zero afterwards too.
            mean = jnp.sum(h) / n_elem
            diff = (h - mean) * mask2d
            var = jnp.sum(diff * diff) / (n_elem - 1)
            x_norm = diff * jax.lax.rsqrt(var)

            # support = x_norm @ W   (bf16 MXU inputs, f32 accumulation)
            support = jnp.dot(x_norm.astype(jnp.bfloat16), w_refs[li][...],
                              preferred_element_type=jnp.float32)

            # out = D^{-1/2} (A + I) D^{-1/2} support; A_norm never materialized.
            scaled = support * d_inv_sqrt
            agg = jnp.dot(a_bf16, scaled.astype(jnp.bfloat16),
                          preferred_element_type=jnp.float32) + scaled
            out = agg * d_inv_sqrt

            if li < num_layers - 1:
                h = jnp.maximum(out, 0.0) + x0          # relu + residual (f32)
            else:
                o_ref[...] = out

    return kernel


# ---------------------------------------------------------------------------
# Row-tiled fallback kernel (large graphs): per layer, stream A in row tiles,
# keep `scaled` (bf16) resident across the grid, fuse D^{-1/2} / self-loop /
# relu / residual into the same pass.
# ---------------------------------------------------------------------------
def make_row_tiled_layer_kernel(with_residual):
    if with_residual:
        def kernel(a_ref, sc_full_ref, sc_tile_ref, d_ref, x0_ref, o_ref):
            agg = jnp.dot(a_ref[...], sc_full_ref[...],
                          preferred_element_type=jnp.float32)
            out = (agg + sc_tile_ref[...]) * d_ref[...]
            o_ref[...] = jnp.maximum(out, 0.0) + x0_ref[...]
    else:
        def kernel(a_ref, sc_full_ref, sc_tile_ref, d_ref, o_ref):
            agg = jnp.dot(a_ref[...], sc_full_ref[...],
                          preferred_element_type=jnp.float32)
            o_ref[...] = (agg + sc_tile_ref[...]) * d_ref[...]
    return kernel


def _row_tiled_aggregate(adj_p, scaled_bf16, scaled_f32, d_p, x0_p, *,
                         row_tile, vmem_limit):
    n_pad = adj_p.shape[0]
    f_out = scaled_bf16.shape[1]
    with_residual = x0_p is not None
    kernel = make_row_tiled_layer_kernel(with_residual)

    in_specs = [
        pl.BlockSpec((row_tile, n_pad), lambda i: (i, 0)),   # A row tile (bf16)
        pl.BlockSpec((n_pad, f_out), lambda i: (0, 0)),      # scaled bf16 (resident)
        pl.BlockSpec((row_tile, f_out), lambda i: (i, 0)),   # scaled f32 tile (self loop)
        pl.BlockSpec((row_tile, 1), lambda i: (i, 0)),       # d_inv_sqrt tile
    ]
    args = [adj_p, scaled_bf16, scaled_f32, d_p]
    if with_residual:
        in_specs.append(pl.BlockSpec((row_tile, x0_p.shape[1]), lambda i: (i, 0)))
        args.append(x0_p)

    out_bytes = n_pad * f_out * 4
    cost = pl.CostEstimate(
        flops=2 * n_pad * n_pad * f_out,
        transcendentals=0,
        bytes_accessed=int(sum(int(a.size) * a.dtype.itemsize for a in args) + out_bytes))

    return pl.pallas_call(
        kernel,
        out_shape=jax.ShapeDtypeStruct((n_pad, f_out), jnp.float32),
        grid=(n_pad // row_tile,),
        in_specs=in_specs,
        out_specs=pl.BlockSpec((row_tile, f_out), lambda i: (i, 0)),
        compiler_params=pltpu.CompilerParams(
            dimension_semantics=("parallel",),
            vmem_limit_bytes=vmem_limit),
        cost_estimate=cost,
    )(*args)


# ---------------------------------------------------------------------------
# Parameter init (deterministic, mirrors shapes in ResGCN.__init__)
# ---------------------------------------------------------------------------
def xavier_uniform(key, fan_in, fan_out):
    a = math.sqrt(6.0 / (fan_in + fan_out))
    return jax.random.uniform(key, (fan_in, fan_out), jnp.float32, -a, a)


def init_resgcn_params(key, in_features, hidden_dims):
    dims = [in_features] + list(hidden_dims)
    keys = jax.random.split(key, len(hidden_dims) + 2)
    bound = 1.0 / math.sqrt(in_features)
    lin_w = jax.random.uniform(
        keys[0], (in_features, hidden_dims[0]), jnp.float32, -bound, bound)
    lin_b = jax.random.uniform(
        keys[1], (hidden_dims[0],), jnp.float32, -bound, bound)
    gcn_ws = [xavier_uniform(keys[2 + i], dims[i], dims[i + 1])
              for i in range(len(hidden_dims))]
    return {"lin_w": lin_w, "lin_b": lin_b, "gcn_ws": gcn_ws}


# ---------------------------------------------------------------------------
# ResGCN forward wrapper
# ---------------------------------------------------------------------------
def resgcn_forward(params, x, adjacency, *, force_tiled=False, row_tile=None):
    # TODO(synk): the list-of-adjacency variant of the torch forward is not handled;
    #             a single dense adjacency (same A for every layer) is assumed.
    x = x.astype(jnp.float32)
    n, f_in = x.shape
    hidden_dims = [int(w.shape[1]) for w in params["gcn_ws"]]
    dims = [f_in] + hidden_dims
    num_layers = len(hidden_dims)
    for hd in hidden_dims[:-1]:
        assert hd == hidden_dims[0], "residual requires matching hidden dims"

    n_pad = _round_up(n, _LANE)
    f_pads = [_round_up(d, _LANE) for d in dims]

    vmem_cap = _vmem_capacity_bytes()
    vmem_limit = int(max(32 << 20, int(0.8 * vmem_cap)))   # generation-aware cap

    # Wrapper-side precompute: deg / d_inv_sqrt (exact on the 0/1 adjacency).
    adj_f32 = adjacency.astype(jnp.float32)
    deg = jnp.sum(adj_f32, axis=1, keepdims=True) + 1.0     # + self loop
    d_inv_sqrt = jax.lax.rsqrt(deg)                         # (n, 1)

    x_p = _pad2d(x, n_pad, f_pads[0])
    adj_p = _pad2d(adj_f32, n_pad, n_pad).astype(jnp.bfloat16)   # 0/1 exact in bf16
    d_p = _pad2d(d_inv_sqrt, n_pad, 1)                            # padded rows -> 0
    lin_w_p = _pad2d(params["lin_w"].astype(jnp.float32),
                     f_pads[0], f_pads[1]).astype(jnp.bfloat16)
    lin_b_p = _pad2d(params["lin_b"].reshape(1, -1).astype(jnp.float32), 1, f_pads[1])
    gcn_w_p = [_pad2d(w.astype(jnp.float32), f_pads[i], f_pads[i + 1]).astype(jnp.bfloat16)
               for i, w in enumerate(params["gcn_ws"])]

    max_f_pad = max(f_pads)
    operand_bytes = (x_p.size * 4 + adj_p.size * 2 + d_p.size * 4
                     + lin_w_p.size * 2 + lin_b_p.size * 4
                     + sum(w.size * 2 for w in gcn_w_p)
                     + n_pad * f_pads[-1] * 4)
    # Live intermediates of the fused kernel: h, x0, x_norm, support, scaled, agg.
    resident_bytes = operand_bytes + 6 * n_pad * max_f_pad * 4
    use_tiled = force_tiled or (resident_bytes > int(0.6 * vmem_limit))

    if not use_tiled:
        kernel = make_fused_resident_kernel(
            n_real=n, layer_in_dims=dims[:-1], num_layers=num_layers,
            has_residual=num_layers > 1)
        flops = 0
        for li in range(num_layers):
            flops += 2 * n_pad * f_pads[li] * f_pads[li + 1]      # x_norm @ W
            flops += 2 * n_pad * n_pad * f_pads[li + 1]           # A @ scaled
        if num_layers > 1:
            flops += 2 * n_pad * f_pads[0] * f_pads[1]            # x0 = Linear(x)
        cost = pl.CostEstimate(flops=int(flops), transcendentals=num_layers,
                               bytes_accessed=int(operand_bytes))
        out_pad = pl.pallas_call(
            kernel,
            out_shape=jax.ShapeDtypeStruct((n_pad, f_pads[-1]), jnp.float32),
            in_specs=[VMEM_SPEC] * (5 + num_layers),
            out_specs=VMEM_SPEC,
            compiler_params=pltpu.CompilerParams(vmem_limit_bytes=vmem_limit),
            cost_estimate=cost,
        )(x_p, adj_p, d_p, lin_w_p, lin_b_p, *gcn_w_p)
    else:
        # Row-tiled fallback: stream A row tiles through a pipelined "parallel"
        # grid axis (dual-TC sharding on v7x); per-layer `scaled` stays resident.
        if row_tile is None:
            row_tile = 512 if vmem_cap <= (64 << 20) else 1024
        row_tile = min(row_tile, n_pad)
        while n_pad % row_tile != 0:
            row_tile -= _LANE
        row_tile = max(row_tile, _LANE)

        row_ids = jnp.arange(n_pad, dtype=jnp.int32).reshape(n_pad, 1)
        row_mask = (row_ids < n).astype(jnp.float32)

        x0_p = None
        if num_layers > 1:
            x0_p = (jnp.dot(x_p.astype(jnp.bfloat16), lin_w_p,
                            preferred_element_type=jnp.float32)
                    + lin_b_p) * row_mask

        h = x_p
        for li in range(num_layers):
            f_real = dims[li]
            n_elem = n * f_real
            col_ids = jnp.arange(h.shape[1], dtype=jnp.int32).reshape(1, -1)
            mask2d = row_mask * (col_ids < f_real).astype(jnp.float32)
            mean = jnp.sum(h) / n_elem
            diff = (h - mean) * mask2d
            var = jnp.sum(diff * diff) / (n_elem - 1)
            x_norm = diff * jax.lax.rsqrt(var)
            support = jnp.dot(x_norm.astype(jnp.bfloat16), gcn_w_p[li],
                              preferred_element_type=jnp.float32)
            scaled_f32 = support * d_p
            scaled_bf16 = scaled_f32.astype(jnp.bfloat16)
            h = _row_tiled_aggregate(
                adj_p, scaled_bf16, scaled_f32, d_p,
                x0_p if li < num_layers - 1 else None,
                row_tile=row_tile, vmem_limit=vmem_limit)
        out_pad = h

    logits = out_pad[:n, :hidden_dims[-1]]
    # TODO(synk): torch.cuda.memory_allocated() has no TPU equivalent; report 0.0.
    memory_alloc = jnp.float32(0.0)
    return logits, memory_alloc


# ---------------------------------------------------------------------------
# Pure-JAX reference (mirrors the torch module, f32 throughout)
# ---------------------------------------------------------------------------
def resgcn_reference(params, x, adjacency):
    x = x.astype(jnp.float32)
    n = x.shape[0]
    adj = adjacency.astype(jnp.float32)
    deg = adj.sum(axis=1) + 1.0
    d = 1.0 / jnp.sqrt(deg)
    a_norm = (adj + jnp.eye(n, dtype=jnp.float32)) * d[:, None] * d[None, :]
    x0 = x @ params["lin_w"] + params["lin_b"]
    h = x
    ws = params["gcn_ws"]
    for i, w in enumerate(ws):
        hn = (h - h.mean()) / jnp.std(h, ddof=1)
        out = a_norm @ (hn @ w)
        if i < len(ws) - 1:
            h = jnp.maximum(out, 0.0) + x0
        else:
            return out


# ---------------------------------------------------------------------------
# Demo
# ---------------------------------------------------------------------------
def _make_adj(key, n):
    a_rand = jax.random.uniform(key, (n, n))
    adj = (a_rand + a_rand.T > 1.0).astype(jnp.float32)
    return adj * (1.0 - jnp.eye(n, dtype=jnp.float32))


if __name__ == "__main__":
    key = jax.random.PRNGKey(0)
    k_x1, k_a1, k_p, k_x2, k_a2 = jax.random.split(key, 5)

    in_features = 16
    hidden_dims = [32, 32, 8]     # residual requires hidden_dims[i]==hidden_dims[0] for i<last
    params = init_resgcn_params(k_p, in_features, hidden_dims)

    # ---- small graph: fully VMEM-resident fused kernel ----
    n1 = 8
    x1 = jax.random.normal(k_x1, (n1, in_features), jnp.float32)
    adj1 = _make_adj(k_a1, n1)
    logits1, mem1 = resgcn_forward(params, x1, adj1)
    jax.block_until_ready(logits1)
    assert logits1.shape == (n1, hidden_dims[-1])
    assert bool(jnp.all(jnp.isfinite(logits1)))
    ref1 = resgcn_reference(params, x1, adj1)
    err1 = float(jnp.max(jnp.abs(logits1 - ref1)))
    assert err1 < 0.1, f"resident-path mismatch: {err1}"

    # ---- larger graph: force the row-tiled grid path (exercises pipelining) ----
    n2 = 300
    x2 = jax.random.normal(k_x2, (n2, in_features), jnp.float32)
    adj2 = _make_adj(k_a2, n2)
    logits2, _ = resgcn_forward(params, x2, adj2, force_tiled=True, row_tile=128)
    jax.block_until_ready(logits2)
    assert logits2.shape == (n2, hidden_dims[-1])
    assert bool(jnp.all(jnp.isfinite(logits2)))
    ref2 = resgcn_reference(params, x2, adj2)
    err2 = float(jnp.max(jnp.abs(logits2 - ref2)))
    assert err2 < 0.1, f"tiled-path mismatch: {err2}"

    print("KERNEL_OK")
</pallas_src>

<mosaic_0001>
module attributes {stable_mosaic.version = 11 : i64} {
  func.func @kernel(%arg0: memref<128x128xf32, #tpu.memory_space<vmem>>, %arg1: memref<128x128xbf16, #tpu.memory_space<vmem>>, %arg2: memref<128x1xf32, #tpu.memory_space<vmem>>, %arg3: memref<128x128xbf16, #tpu.memory_space<vmem>>, %arg4: memref<1x128xf32, #tpu.memory_space<vmem>>, %arg5: memref<128x128xbf16, #tpu.memory_space<vmem>>, %arg6: memref<128x128xbf16, #tpu.memory_space<vmem>>, %arg7: memref<128x128xbf16, #tpu.memory_space<vmem>>, %arg8: memref<128x128xf32, #tpu.memory_space<vmem>>) attributes {dimension_semantics = [], scalar_prefetch = 0 : i64, scratch_operands = 0 : i64, tpu.core_type = #tpu.core_type<tc>} {
    %0 = tpu.iota {dimensions = array<i32: 0>} : vector<128x1xi32>
    %c8_i32 = arith.constant 8 : i32
    %1 = vector.broadcast %c8_i32 : i32 to vector<128x1xi32>
    %2 = arith.cmpi slt, %0, %1 : vector<128x1xi32>
    %3 = arith.extui %2 : vector<128x1xi1> to vector<128x1xi32>
    %4 = arith.sitofp %3 : vector<128x1xi32> to vector<128x1xf32>
    %c0 = arith.constant 0 : index
    %c0_0 = arith.constant 0 : index
    %5 = vector.load %arg1[%c0, %c0_0] : memref<128x128xbf16, #tpu.memory_space<vmem>>, vector<128x128xbf16>
    %c0_1 = arith.constant 0 : index
    %c0_2 = arith.constant 0 : index
    %6 = vector.load %arg2[%c0_1, %c0_2] : memref<128x1xf32, #tpu.memory_space<vmem>>, vector<128x1xf32>
    %c0_3 = arith.constant 0 : index
    %c0_4 = arith.constant 0 : index
    %7 = vector.load %arg0[%c0_3, %c0_4] : memref<128x128xf32, #tpu.memory_space<vmem>>, vector<128x128xf32>
    %8 = arith.truncf %7 : vector<128x128xf32> to vector<128x128xbf16>
    %c0_5 = arith.constant 0 : index
    %c0_6 = arith.constant 0 : index
    %9 = vector.load %arg3[%c0_5, %c0_6] : memref<128x128xbf16, #tpu.memory_space<vmem>>, vector<128x128xbf16>
    %cst = arith.constant dense<0.000000e+00> : vector<128x128xf32>
    %10 = tpu.matmul %8, %9, %cst {dimension_numbers = #tpu.dot_dimension_numbers<[1], [0], [0], [1], [0, 0, 1, 1], [], []>} : vector<128x128xbf16>, vector<128x128xbf16>, vector<128x128xf32> -> vector<128x128xf32>
    %c0_7 = arith.constant 0 : index
    %c0_8 = arith.constant 0 : index
    %11 = vector.load %arg4[%c0_7, %c0_8] : memref<1x128xf32, #tpu.memory_space<vmem>>, vector<1x128xf32>
    %12 = vector.broadcast %11 : vector<1x128xf32> to vector<128x128xf32>
    %13 = arith.addf %10, %12 : vector<128x128xf32>
    %14 = vector.broadcast %4 : vector<128x1xf32> to vector<128x128xf32>
    %15 = arith.mulf %13, %14 : vector<128x128xf32>
    %16 = tpu.iota {dimensions = array<i32: 1>} : vector<1x128xi32>
    %c16_i32 = arith.constant 16 : i32
    %17 = vector.broadcast %c16_i32 : i32 to vector<1x128xi32>
    %18 = arith.cmpi slt, %16, %17 : vector<1x128xi32>
    %19 = arith.extui %18 : vector<1x128xi1> to vector<1x128xi32>
    %20 = arith.sitofp %19 : vector<1x128xi32> to vector<1x128xf32>
    %21 = vector.broadcast %4 : vector<128x1xf32> to vector<128x128xf32>
    %22 = vector.broadcast %20 : vector<1x128xf32> to vector<128x128xf32>
    %23 = arith.mulf %21, %22 : vector<128x128xf32>
    %24 = vector.shape_cast %7 : vector<128x128xf32> to vector<1x128x128xf32>
    %cst_9 = arith.constant dense<0.000000e+00> : vector<1xf32>
    %25 = vector.multi_reduction <add>, %24, %cst_9 [1, 2] : vector<1x128x128xf32> to vector<1xf32>
    %26 = vector.shape_cast %25 : vector<1xf32> to vector<1x1x1xf32>
    %27 = vector.extract %26[0, 0, 0] : f32 from vector<1x1x1xf32>
    %cst_10 = arith.constant 1.280000e+02 : f32
    %28 = arith.divf %27, %cst_10 : f32
    %29 = vector.broadcast %28 : f32 to vector<128x128xf32>
    %30 = arith.subf %7, %29 : vector<128x128xf32>
    %31 = arith.mulf %30, %23 : vector<128x128xf32>
    %32 = arith.mulf %31, %31 : vector<128x128xf32>
    %33 = vector.shape_cast %32 : vector<128x128xf32> to vector<1x128x128xf32>
    %cst_11 = arith.constant dense<0.000000e+00> : vector<1xf32>
    %34 = vector.multi_reduction <add>, %33, %cst_11 [1, 2] : vector<1x128x128xf32> to vector<1xf32>
    %35 = vector.shape_cast %34 : vector<1xf32> to vector<1x1x1xf32>
    %36 = vector.extract %35[0, 0, 0] : f32 from vector<1x1x1xf32>
    %cst_12 = arith.constant 1.270000e+02 : f32
    %37 = arith.divf %36, %cst_12 : f32
    %38 = math.rsqrt %37 : f32
    %39 = vector.broadcast %38 : f32 to vector<128x128xf32>
    %40 = arith.mulf %31, %39 : vector<128x128xf32>
    %41 = arith.truncf %40 : vector<128x128xf32> to vector<128x128xbf16>
    %c0_13 = arith.constant 0 : index
    %c0_14 = arith.constant 0 : index
    %42 = vector.load %arg5[%c0_13, %c0_14] : memref<128x128xbf16, #tpu.memory_space<vmem>>, vector<128x128xbf16>
    %cst_15 = arith.constant dense<0.000000e+00> : vector<128x128xf32>
    %43 = tpu.matmul %41, %42, %cst_15 {dimension_numbers = #tpu.dot_dimension_numbers<[1], [0], [0], [1], [0, 0, 1, 1], [], []>} : vector<128x128xbf16>, vector<128x128xbf16>, vector<128x128xf32> -> vector<128x128xf32>
    %44 = vector.broadcast %6 : vector<128x1xf32> to vector<128x128xf32>
    %45 = arith.mulf %43, %44 : vector<128x128xf32>
    %46 = arith.truncf %45 : vector<128x128xf32> to vector<128x128xbf16>
    %cst_16 = arith.constant dense<0.000000e+00> : vector<128x128xf32>
    %47 = tpu.matmul %5, %46, %cst_16 {dimension_numbers = #tpu.dot_dimension_numbers<[1], [0], [0], [1], [0, 0, 1, 1], [], []>} : vector<128x128xbf16>, vector<128x128xbf16>, vector<128x128xf32> -> vector<128x128xf32>
    %48 = arith.addf %47, %45 : vector<128x128xf32>
    %49 = vector.broadcast %6 : vector<128x1xf32> to vector<128x128xf32>
    %50 = arith.mulf %48, %49 : vector<128x128xf32>
    %cst_17 = arith.constant 0.000000e+00 : f32
    %51 = vector.broadcast %cst_17 : f32 to vector<128x128xf32>
    %52 = arith.maximumf %50, %51 : vector<128x128xf32>
    %53 = arith.addf %52, %15 : vector<128x128xf32>
    %54 = tpu.iota {dimensions = array<i32: 1>} : vector<1x128xi32>
    %c32_i32 = arith.constant 32 : i32
    %55 = vector.broadcast %c32_i32 : i32 to vector<1x128xi32>
    %56 = arith.cmpi slt, %54, %55 : vector<1x128xi32>
    %57 = arith.extui %56 : vector<1x128xi1> to vector<1x128xi32>
    %58 = arith.sitofp %57 : vector<1x128xi32> to vector<1x128xf32>
    %59 = vector.broadcast %4 : vector<128x1xf32> to vector<128x128xf32>
    %60 = vector.broadcast %58 : vector<1x128xf32> to vector<128x128xf32>
    %61 = arith.mulf %59, %60 : vector<128x128xf32>
    %62 = vector.shape_cast %53 : vector<128x128xf32> to vector<1x128x128xf32>
    %cst_18 = arith.constant dense<0.000000e+00> : vector<1xf32>
    %63 = vector.multi_reduction <add>, %62, %cst_18 [1, 2] : vector<1x128x128xf32> to vector<1xf32>
    %64 = vector.shape_cast %63 : vector<1xf32> to vector<1x1x1xf32>
    %65 = vector.extract %64[0, 0, 0] : f32 from vector<1x1x1xf32>
    %cst_19 = arith.constant 2.560000e+02 : f32
    %66 = arith.divf %65, %cst_19 : f32
    %67 = vector.broadcast %66 : f32 to vector<128x128xf32>
    %68 = arith.subf %53, %67 : vector<128x128xf32>
    %69 = arith.mulf %68, %61 : vector<128x128xf32>
    %70 = arith.mulf %69, %69 : vector<128x128xf32>
    %71 = vector.shape_cast %70 : vector<128x128xf32> to vector<1x128x128xf32>
    %cst_20 = arith.constant dense<0.000000e+00> : vector<1xf32>
    %72 = vector.multi_reduction <add>, %71, %cst_20 [1, 2] : vector<1x128x128xf32> to vector<1xf32>
    %73 = vector.shape_cast %72 : vector<1xf32> to vector<1x1x1xf32>
    %74 = vector.extract %73[0, 0, 0] : f32 from vector<1x1x1xf32>
    %cst_21 = arith.constant 2.550000e+02 : f32
    %75 = arith.divf %74, %cst_21 : f32
    %76 = math.rsqrt %75 : f32
    %77 = vector.broadcast %76 : f32 to vector<128x128xf32>
    %78 = arith.mulf %69, %77 : vector<128x128xf32>
    %79 = arith.truncf %78 : vector<128x128xf32> to vector<128x128xbf16>
    %c0_22 = arith.constant 0 : index
    %c0_23 = arith.constant 0 : index
    %80 = vector.load %arg6[%c0_22, %c0_23] : memref<128x128xbf16, #tpu.memory_space<vmem>>, vector<128x128xbf16>
    %cst_24 = arith.constant dense<0.000000e+00> : vector<128x128xf32>
    %81 = tpu.matmul %79, %80, %cst_24 {dimension_numbers = #tpu.dot_dimension_numbers<[1], [0], [0], [1], [0, 0, 1, 1], [], []>} : vector<128x128xbf16>, vector<128x128xbf16>, vector<128x128xf32> -> vector<128x128xf32>
    %82 = vector.broadcast %6 : vector<128x1xf32> to vector<128x128xf32>
    %83 = arith.mulf %81, %82 : vector<128x128xf32>
    %84 = arith.truncf %83 : vector<128x128xf32> to vector<128x128xbf16>
    %cst_25 = arith.constant dense<0.000000e+00> : vector<128x128xf32>
    %85 = tpu.matmul %5, %84, %cst_25 {dimension_numbers = #tpu.dot_dimension_numbers<[1], [0], [0], [1], [0, 0, 1, 1], [], []>} : vector<128x128xbf16>, vector<128x128xbf16>, vector<128x128xf32> -> vector<128x128xf32>
    %86 = arith.addf %85, %83 : vector<128x128xf32>
    %87 = vector.broadcast %6 : vector<128x1xf32> to vector<128x128xf32>
    %88 = arith.mulf %86, %87 : vector<128x128xf32>
    %cst_26 = arith.constant 0.000000e+00 : f32
    %89 = vector.broadcast %cst_26 : f32 to vector<128x128xf32>
    %90 = arith.maximumf %88, %89 : vector<128x128xf32>
    %91 = arith.addf %90, %15 : vector<128x128xf32>
    %92 = tpu.iota {dimensions = array<i32: 1>} : vector<1x128xi32>
    %c32_i32_27 = arith.constant 32 : i32
    %93 = vector.broadcast %c32_i32_27 : i32 to vector<1x128xi32>
    %94 = arith.cmpi slt, %92, %93 : vector<1x128xi32>
    %95 = arith.extui %94 : vector<1x128xi1> to vector<1x128xi32>
    %96 = arith.sitofp %95 : vector<1x128xi32> to vector<1x128xf32>
    %97 = vector.broadcast %4 : vector<128x1xf32> to vector<128x128xf32>
    %98 = vector.broadcast %96 : vector<1x128xf32> to vector<128x128xf32>
    %99 = arith.mulf %97, %98 : vector<128x128xf32>
    %100 = vector.shape_cast %91 : vector<128x128xf32> to vector<1x128x128xf32>
    %cst_28 = arith.constant dense<0.000000e+00> : vector<1xf32>
    %101 = vector.multi_reduction <add>, %100, %cst_28 [1, 2] : vector<1x128x128xf32> to vector<1xf32>
    %102 = vector.shape_cast %101 : vector<1xf32> to vector<1x1x1xf32>
    %103 = vector.extract %102[0, 0, 0] : f32 from vector<1x1x1xf32>
    %cst_29 = arith.constant 2.560000e+02 : f32
    %104 = arith.divf %103, %cst_29 : f32
    %105 = vector.broadcast %104 : f32 to vector<128x128xf32>
    %106 = arith.subf %91, %105 : vector<128x128xf32>
    %107 = arith.mulf %106, %99 : vector<128x128xf32>
    %108 = arith.mulf %107, %107 : vector<128x128xf32>
    %109 = vector.shape_cast %108 : vector<128x128xf32> to vector<1x128x128xf32>
    %cst_30 = arith.constant dense<0.000000e+00> : vector<1xf32>
    %110 = vector.multi_reduction <add>, %109, %cst_30 [1, 2] : vector<1x128x128xf32> to vector<1xf32>
    %111 = vector.shape_cast %110 : vector<1xf32> to vector<1x1x1xf32>
    %112 = vector.extract %111[0, 0, 0] : f32 from vector<1x1x1xf32>
    %cst_31 = arith.constant 2.550000e+02 : f32
    %113 = arith.divf %112, %cst_31 : f32
    %114 = math.rsqrt %113 : f32
    %115 = vector.broadcast %114 : f32 to vector<128x128xf32>
    %116 = arith.mulf %107, %115 : vector<128x128xf32>
    %117 = arith.truncf %116 : vector<128x128xf32> to vector<128x128xbf16>
    %c0_32 = arith.constant 0 : index
    %c0_33 = arith.constant 0 : index
    %118 = vector.load %arg7[%c0_32, %c0_33] : memref<128x128xbf16, #tpu.memory_space<vmem>>, vector<128x128xbf16>
    %cst_34 = arith.constant dense<0.000000e+00> : vector<128x128xf32>
    %119 = tpu.matmul %117, %118, %cst_34 {dimension_numbers = #tpu.dot_dimension_numbers<[1], [0], [0], [1], [0, 0, 1, 1], [], []>} : vector<128x128xbf16>, vector<128x128xbf16>, vector<128x128xf32> -> vector<128x128xf32>
    %120 = vector.broadcast %6 : vector<128x1xf32> to vector<128x128xf32>
    %121 = arith.mulf %119, %120 : vector<128x128xf32>
    %122 = arith.truncf %121 : vector<128x128xf32> to vector<128x128xbf16>
    %cst_35 = arith.constant dense<0.000000e+00> : vector<128x128xf32>
    %123 = tpu.matmul %5, %122, %cst_35 {dimension_numbers = #tpu.dot_dimension_numbers<[1], [0], [0], [1], [0, 0, 1, 1], [], []>} : vector<128x128xbf16>, vector<128x128xbf16>, vector<128x128xf32> -> vector<128x128xf32>
    %124 = arith.addf %123, %121 : vector<128x128xf32>
    %125 = vector.broadcast %6 : vector<128x1xf32> to vector<128x128xf32>
    %126 = arith.mulf %124, %125 : vector<128x128xf32>
    %c0_36 = arith.constant 0 : index
    %c0_37 = arith.constant 0 : index
    %127 = vector.load %arg8[%c0_36, %c0_37] : memref<128x128xf32, #tpu.memory_space<vmem>>, vector<128x128xf32>
    tpu.vector_store %arg8[%c0_36, %c0_37], %126 {strides = array<i32>} : memref<128x128xf32, #tpu.memory_space<vmem>>, vector<128x128xf32>,
    return
  }
}

</mosaic_0001>

<llo_original>
// kernel: tpu_custom_call.1
$region0: #{tpu_custom_call.1}
  #allocation0 [shape = 'u32[]', space=smem, size = 0x4, offset = 0x4, fixed_abs, tag = 'smem constant byte address 0x4 - core index']
  #allocation1 [shape = 'u32[72,128]{1,0:T(1,128)}', space=vmem, size = 0x9000, scoped, tag = 'internal scratch']
  %s0 = inlined_call_operand.vmem [shape: f32[128,128], index: 0, kind: input, shape index: {}]
  %s1 = inlined_call_operand.hbm [shape: bf16[128,128], index: 1, kind: input, shape index: {}]
  %s2 = inlined_call_operand.vmem [shape: f32[128,1], index: 2, kind: input, shape index: {}]
  %s3 = inlined_call_operand.hbm [shape: bf16[128,128], index: 3, kind: input, shape index: {}]
  %s4 = inlined_call_operand.vmem [shape: f32[1,128], index: 4, kind: input, shape index: {}]
  %s5 = inlined_call_operand.hbm [shape: bf16[128,128], index: 5, kind: input, shape index: {}]
  %s6 = inlined_call_operand.hbm [shape: bf16[128,128], index: 6, kind: input, shape index: {}]
  %s7 = inlined_call_operand.hbm [shape: bf16[128,128], index: 7, kind: input, shape index: {}]
  %s8 = inlined_call_operand.hbm [shape: f32[128,128], index: 8, kind: output, shape index: {}]
  %s9 = sld [smem:[#allocation0]]
  $region62: #{tpu_custom_call.1} parent=0
    _
  %s11 = ssub.s32 1, %s9
  %s12 = scalar_select 0, %s11, %s9
  $region1: #{tpu_custom_call.1} parent=0
    #allocation2 [shape = 'u8[32768]{0}', space=vmem, size = 0x8000, scoped, tag = 'input window, operand 1, single buffered']
    #allocation3 [shape = 's32[1]{0}', space=sflag, size = 0x4, scoped, tag = 'scoped memory for tpu_custom_call.1']
    #allocation4 [shape = 's32[1]{0}', space=sflag, size = 0x4, scoped, tag = 'scoped memory for tpu_custom_call.1']
    #allocation5 [shape = 'u8[32768]{0}', space=vmem, size = 0x8000, scoped, tag = 'input window, operand 3, single buffered']
    #allocation6 [shape = 's32[1]{0}', space=sflag, size = 0x4, scoped, tag = 'scoped memory for tpu_custom_call.1']
    #allocation7 [shape = 'u8[32768]{0}', space=vmem, size = 0x8000, scoped, tag = 'input window, operand 5, single buffered']
    #allocation8 [shape = 'u8[32768]{0}', space=vmem, size = 0x8000, scoped, tag = 'input window, operand 6, single buffered']
    #allocation9 [shape = 's32[1]{0}', space=sflag, size = 0x4, scoped, tag = 'scoped memory for tpu_custom_call.1']
    #allocation10 [shape = 'u8[32768]{0}', space=vmem, size = 0x8000, scoped, tag = 'input window, operand 7, single buffered']
    #allocation11 [shape = 'u8[65536]{0}', space=vmem, size = 0x10000, scoped, tag = 'output window, operand 0, single buffered']
    %13 = vsyncpa [#allocation3], 0
    %14 = vsyncpa [#allocation6], 0
    %15 = vsyncpa [#allocation9], 0
    %16 = vsyncpa [#allocation4], 0
    // Predicated region
    $region2: #{tpu_custom_call.1} parent=1 // pred_check
      _
    $region3: #{tpu_custom_call.1} parent=1 // pred_check_branch
      %18 = sbr.rel (0) target = $region5
    $region4: #{tpu_custom_call.1} parent=1 // pred_region
      _
    $region5: #{tpu_custom_call.1} parent=1 // pred_fallthru
      _
    // Predicated region
    $region6: #{tpu_custom_call.1} parent=1 // pred_check
      _
    $region7: #{tpu_custom_call.1} parent=1 // pred_check_branch
      %20 = sbr.rel (0) target = $region9
    $region8: #{tpu_custom_call.1} parent=1 // pred_region
      %22 = vsyncadd [#allocation3], 0
      %s23 = sshll.u32 %s1, 4
      %s24 = int_to_ptr.hbm [resolvable:$true] %s23
      %s25 = sshll.u32 [#allocation2], 4
      %s26 = int_to_ptr.vmem [resolvable:$true] %s25
      %31 = dma.hbm_to_vmem [thread:$0]  %s24, 1024, %s26, [#allocation3], 64, 64, 4
    $region9: #{tpu_custom_call.1} parent=1 // pred_fallthru
      _
    // Predicated region
    $region10: #{tpu_custom_call.1} parent=1 // pred_check
      _
    $region11: #{tpu_custom_call.1} parent=1 // pred_check_branch
      %33 = sbr.rel (0) target = $region13
    $region12: #{tpu_custom_call.1} parent=1 // pred_region
      _
    $region13: #{tpu_custom_call.1} parent=1 // pred_fallthru
      _
    // Predicated region
    $region14: #{tpu_custom_call.1} parent=1 // pred_check
      _
    $region15: #{tpu_custom_call.1} parent=1 // pred_check_branch
      %35 = sbr.rel (0) target = $region17
    $region16: #{tpu_custom_call.1} parent=1 // pred_region
      %37 = vsyncadd [#allocation6], 0
      %s38 = sshll.u32 %s3, 4
      %s39 = int_to_ptr.hbm [resolvable:$true] %s38
      %s40 = sshll.u32 [#allocation5], 4
      %s41 = int_to_ptr.vmem [resolvable:$true] %s40
      %46 = dma.hbm_to_vmem [thread:$0]  %s39, 1024, %s41, [#allocation6], 64, 64, 4
    $region17: #{tpu_custom_call.1} parent=1 // pred_fallthru
      _
    // Predicated region
    $region18: #{tpu_custom_call.1} parent=1 // pred_check
      _
    $region19: #{tpu_custom_call.1} parent=1 // pred_check_branch
      %48 = sbr.rel (0) target = $region21
    $region20: #{tpu_custom_call.1} parent=1 // pred_region
      _
    $region21: #{tpu_custom_call.1} parent=1 // pred_fallthru
      _
    // Predicated region
    $region22: #{tpu_custom_call.1} parent=1 // pred_check
      _
    $region23: #{tpu_custom_call.1} parent=1 // pred_check_branch
      %50 = sbr.rel (0) target = $region25
    $region24: #{tpu_custom_call.1} parent=1 // pred_region
      %52 = vsyncadd [#allocation6], 0
      %s53 = sshll.u32 %s5, 4
      %s54 = int_to_ptr.hbm [resolvable:$true] %s53
      %s55 = sshll.u32 [#allocation7], 4
      %s56 = int_to_ptr.vmem [resolvable:$true] %s55
      %61 = dma.hbm_to_vmem [thread:$0]  %s54, 1024, %s56, [#allocation6], 64, 64, 4
    $region25: #{tpu_custom_call.1} parent=1 // pred_fallthru
      _
    // Predicated region
    $region26: #{tpu_custom_call.1} parent=1 // pred_check
      _
    $region27: #{tpu_custom_call.1} parent=1 // pred_check_branch
      %63 = sbr.rel (0) target = $region29
    $region28: #{tpu_custom_call.1} parent=1 // pred_region
      %65 = vsyncadd [#allocation9], 0
      %s66 = sshll.u32 %s6, 4
      %s67 = int_to_ptr.hbm [resolvable:$true] %s66
      %s68 = sshll.u32 [#allocation8], 4
      %s69 = int_to_ptr.vmem [resolvable:$true] %s68
      %74 = dma.hbm_to_vmem [thread:$0]  %s67, 1024, %s69, [#allocation9], 64, 64, 4
    $region29: #{tpu_custom_call.1} parent=1 // pred_fallthru
      _
    // Predicated region
    $region30: #{tpu_custom_call.1} parent=1 // pred_check
      _
    $region31: #{tpu_custom_call.1} parent=1 // pred_check_branch
      %76 = sbr.rel (0) target = $region33
    $region32: #{tpu_custom_call.1} parent=1 // pred_region
      %78 = vsyncadd [#allocation9], 0
      %s79 = sshll.u32 %s7, 4
      %s80 = int_to_ptr.hbm [resolvable:$true] %s79
      %s81 = sshll.u32 [#allocation10], 4
      %s82 = int_to_ptr.vmem [resolvable:$true] %s81
      %87 = dma.hbm_to_vmem [thread:$0]  %s80, 1024, %s82, [#allocation9], 64, 64, 4
    $region33: #{tpu_custom_call.1} parent=1 // pred_fallthru
      _
    // Predicated region
    $region34: #{tpu_custom_call.1} parent=1 // pred_check
      _
    $region35: #{tpu_custom_call.1} parent=1 // pred_check_branch
      %89 = sbr.rel (0) target = $region37
    $region36: #{tpu_custom_call.1} parent=1 // pred_region
      %91 = dma.done [#allocation3], 1024
    $region37: #{tpu_custom_call.1} parent=1 // pred_fallthru
      _
    // Predicated region
    $region38: #{tpu_custom_call.1} parent=1 // pred_check
      _
    $region39: #{tpu_custom_call.1} parent=1 // pred_check_branch
      %93 = sbr.rel (0) target = $region41
    $region40: #{tpu_custom_call.1} parent=1 // pred_region
      %95 = dma.done [#allocation6], 1024
    $region41: #{tpu_custom_call.1} parent=1 // pred_fallthru
      _
    // Predicated region
    $region42: #{tpu_custom_call.1} parent=1 // pred_check
      _
    $region43: #{tpu_custom_call.1} parent=1 // pred_check_branch
      %97 = sbr.rel (0) target = $region45
    $region44: #{tpu_custom_call.1} parent=1 // pred_region
      %99 = dma.done [#allocation6], 1024
    $region45: #{tpu_custom_call.1} parent=1 // pred_fallthru
      _
    // Predicated region
    $region46: #{tpu_custom_call.1} parent=1 // pred_check
      _
    $region47: #{tpu_custom_call.1} parent=1 // pred_check_branch
      %101 = sbr.rel (0) target = $region49
    $region48: #{tpu_custom_call.1} parent=1 // pred_region
      %103 = dma.done [#allocation9], 1024
    $region49: #{tpu_custom_call.1} parent=1 // pred_fallthru
      _
    // Predicated region
    $region50: #{tpu_custom_call.1} parent=1 // pred_check
      _
    $region51: #{tpu_custom_call.1} parent=1 // pred_check_branch
      %105 = sbr.rel (0) target = $region53
    $region52: #{tpu_custom_call.1} parent=1 // pred_region
      %107 = dma.done [#allocation9], 1024
    $region53: #{tpu_custom_call.1} parent=1 // pred_fallthru
      _
    %v108 = vlaneseq
    %v109 = vshrl.u32 %v108, 7
    %v110 = vadd.s32 %v109, 8
    %v111 = vadd.s32 %v109, 16
    %v112 = vadd.s32 %v109, 24
    %v113 = vadd.s32 %v109, 32
    %v114 = vadd.s32 %v109, 40
    %v115 = vadd.s32 %v109, 48
    %v116 = vadd.s32 %v109, 56
    %v117 = vadd.s32 %v109, 64
    %v118 = vadd.s32 %v109, 72
    %v119 = vadd.s32 %v109, 80
    %v120 = vadd.s32 %v109, 88
    %v121 = vadd.s32 %v109, 96
    %v122 = vadd.s32 %v109, 104
    %v123 = vadd.s32 %v109, 112
    %v124 = vadd.s32 %v109, 120
    %vm125 = vcmp.lt.s32.totalorder %v109, 8
    %vm126 = vcmp.lt.s32.totalorder %v110, 8
    %vm127 = vcmp.lt.s32.totalorder %v111, 8
    %vm128 = vcmp.lt.s32.totalorder %v112, 8
    %vm129 = vcmp.lt.s32.totalorder %v113, 8
    %vm130 = vcmp.lt.s32.totalorder %v114, 8
    %vm131 = vcmp.lt.s32.totalorder %v115, 8
    %vm132 = vcmp.lt.s32.totalorder %v116, 8
    %vm133 = vcmp.lt.s32.totalorder %v117, 8
    %vm134 = vcmp.lt.s32.totalorder %v118, 8
    %vm135 = vcmp.lt.s32.totalorder %v119, 8
    %vm136 = vcmp.lt.s32.totalorder %v120, 8
    %vm137 = vcmp.lt.s32.totalorder %v121, 8
    %vm138 = vcmp.lt.s32.totalorder %v122, 8
    %vm139 = vcmp.lt.s32.totalorder %v123, 8
    %vm140 = vcmp.lt.s32.totalorder %v124, 8
    %v141 = vsel %vm125, 1, 0
    %v142 = vsel %vm126, 1, 0
    %v143 = vsel %vm127, 1, 0
    %v144 = vsel %vm128, 1, 0
    %v145 = vsel %vm129, 1, 0
    %v146 = vsel %vm130, 1, 0
    %v147 = vsel %vm131, 1, 0
    %v148 = vsel %vm132, 1, 0
    %v149 = vsel %vm133, 1, 0
    %v150 = vsel %vm134, 1, 0
    %v151 = vsel %vm135, 1, 0
    %v152 = vsel %vm136, 1, 0
    %v153 = vsel %vm137, 1, 0
    %v154 = vsel %vm138, 1, 0
    %v155 = vsel %vm139, 1, 0
    %v156 = vsel %vm140, 1, 0
    %v157 = vcvt.s32.f32 %v141
    %v158 = vcvt.s32.f32 %v142
    %v159 = vcvt.s32.f32 %v143
    %v160 = vcvt.s32.f32 %v144
    %v161 = vcvt.s32.f32 %v145
    %v162 = vcvt.s32.f32 %v146
    %v163 = vcvt.s32.f32 %v147
    %v164 = vcvt.s32.f32 %v148
    %v165 = vcvt.s32.f32 %v149
    %v166 = vcvt.s32.f32 %v150
    %v167 = vcvt.s32.f32 %v151
    %v168 = vcvt.s32.f32 %v152
    %v169 = vcvt.s32.f32 %v153
    %v170 = vcvt.s32.f32 %v154
    %v171 = vcvt.s32.f32 %v155
    %v172 = vcvt.s32.f32 %v156
    %v173 = vld [vmem:[#allocation2] sm:$0xf]
    %v174 = vld [vmem:[#allocation2 + $0x4] sm:$0xf]
    %v175 = vld [vmem:[#allocation2 + $0x8] sm:$0xf]
    %v176 = vld [vmem:[#allocation2 + $0xc] sm:$0xf]
    %v177 = vld [vmem:[#allocation2 + $0x10] sm:$0xf]
    %v178 = vld [vmem:[#allocation2 + $0x14] sm:$0xf]
    %v179 = vld [vmem:[#allocation2 + $0x18] sm:$0xf]
    %v180 = vld [vmem:[#allocation2 + $0x1c] sm:$0xf]
    %v181 = vld [vmem:[#allocation2 + $0x20] sm:$0xf]
    %v182 = vld [vmem:[#allocation2 + $0x24] sm:$0xf]
    %v183 = vld [vmem:[#allocation2 + $0x28] sm:$0xf]
    %v184 = vld [vmem:[#allocation2 + $0x2c] sm:$0xf]
    %v185 = vld [vmem:[#allocation2 + $0x30] sm:$0xf]
    %v186 = vld [vmem:[#allocation2 + $0x34] sm:$0xf]
    %v187 = vld [vmem:[#allocation2 + $0x38] sm:$0xf]
    %v188 = vld [vmem:[#allocation2 + $0x3c] sm:$0xf]
    %v189 = vld [vmem:[%s2] sm:$0xff]
    %v190 = vld [vmem:[%s2 + $0x8] sm:$0xff]
    %v191 = vld [vmem:[%s2 + $0x10] sm:$0xff]
    %v192 = vld [vmem:[%s2 + $0x18] sm:$0xff]
    %v193 = vld [vmem:[%s2 + $0x20] sm:$0xff]
    %v194 = vld [vmem:[%s2 + $0x28] sm:$0xff]
    %v195 = vld [vmem:[%s2 + $0x30] sm:$0xff]
    %v196 = vld [vmem:[%s2 + $0x38] sm:$0xff]
    %v197 = vld [vmem:[%s2 + $0x40] sm:$0xff]
    %v198 = vld [vmem:[%s2 + $0x48] sm:$0xff]
    %v199 = vld [vmem:[%s2 + $0x50] sm:$0xff]
    %v200 = vld [vmem:[%s2 + $0x58] sm:$0xff]
    %v201 = vld [vmem:[%s2 + $0x60] sm:$0xff]
    %v202 = vld [vmem:[%s2 + $0x68] sm:$0xff]
    %v203 = vld [vmem:[%s2 + $0x70] sm:$0xff]
    %v204 = vld [vmem:[%s2 + $0x78] sm:$0xff]
    %v205 = vld [vmem:[%s0] sm:$0xff]
    %v206 = vld [vmem:[%s0 + $0x8] sm:$0xff]
    %v207 = vld [vmem:[%s0 + $0x10] sm:$0xff]
    %v208 = vld [vmem:[%s0 + $0x18] sm:$0xff]
    %v209 = vld [vmem:[%s0 + $0x20] sm:$0xff]
    %v210 = vld [vmem:[%s0 + $0x28] sm:$0xff]
    %v211 = vld [vmem:[%s0 + $0x30] sm:$0xff]
    %v212 = vld [vmem:[%s0 + $0x38] sm:$0xff]
    %v213 = vld [vmem:[%s0 + $0x40] sm:$0xff]
    %v214 = vld [vmem:[%s0 + $0x48] sm:$0xff]
    %v215 = vld [vmem:[%s0 + $0x50] sm:$0xff]
    %v216 = vld [vmem:[%s0 + $0x58] sm:$0xff]
    %v217 = vld [vmem:[%s0 + $0x60] sm:$0xff]
    %v218 = vld [vmem:[%s0 + $0x68] sm:$0xff]
    %v219 = vld [vmem:[%s0 + $0x70] sm:$0xff]
    %v220 = vld [vmem:[%s0 + $0x78] sm:$0xff]
    %v221 = vpack.c.bf16 %v206, %v205
    %v222 = vpack.c.bf16 %v208, %v207
    %v223 = vpack.c.bf16 %v210, %v209
    %v224 = vpack.c.bf16 %v212, %v211
    %v225 = vpack.c.bf16 %v214, %v213
    %v226 = vpack.c.bf16 %v216, %v215
    %v227 = vpack.c.bf16 %v218, %v217
    %v228 = vpack.c.bf16 %v220, %v219
    %v229 = vld [vmem:[#allocation5] sm:$0xf]
    %v230 = vld [vmem:[#allocation5 + $0x4] sm:$0xf]
    %v231 = vld [vmem:[#allocation5 + $0x8] sm:$0xf]
    %v232 = vld [vmem:[#allocation5 + $0xc] sm:$0xf]
    %v233 = vld [vmem:[#allocation5 + $0x10] sm:$0xf]
    %v234 = vld [vmem:[#allocation5 + $0x14] sm:$0xf]
    %v235 = vld [vmem:[#allocation5 + $0x18] sm:$0xf]
    %v236 = vld [vmem:[#allocation5 + $0x1c] sm:$0xf]
    %v237 = vld [vmem:[#allocation5 + $0x20] sm:$0xf]
    %v238 = vld [vmem:[#allocation5 + $0x24] sm:$0xf]
    %v239 = vld [vmem:[#allocation5 + $0x28] sm:$0xf]
    %v240 = vld [vmem:[#allocation5 + $0x2c] sm:$0xf]
    %v241 = vld [vmem:[#allocation5 + $0x30] sm:$0xf]
    %v242 = vld [vmem:[#allocation5 + $0x34] sm:$0xf]
    %v243 = vld [vmem:[#allocation5 + $0x38] sm:$0xf]
    %v244 = vld [vmem:[#allocation5 + $0x3c] sm:$0xf]
    %v245 = vld [vmem:[%s4] sm:$0x1]
    %v247 = vperm.slane %v245, 0
    %v265 = vunpack.c.l.b16 %v229
    %v266 = vunpack.c.l.b16 %v230
    %v267 = vunpack.c.l.b16 %v231
    %v268 = vunpack.c.l.b16 %v232
    %v269 = vunpack.c.l.b16 %v233
    %v270 = vunpack.c.l.b16 %v234
    %v271 = vunpack.c.l.b16 %v235
    %v272 = vunpack.c.l.b16 %v236
    %v273 = vunpack.c.l.b16 %v237
    %v274 = vunpack.c.l.b16 %v238
    %v275 = vunpack.c.l.b16 %v239
    %v276 = vunpack.c.l.b16 %v240
    %v277 = vunpack.c.l.b16 %v241
    %v278 = vunpack.c.l.b16 %v242
    %v279 = vunpack.c.l.b16 %v243
    %v280 = vunpack.c.l.b16 %v244
    %v281 = vpack.c.b16 %v266, %v265
    %v282 = vpack.c.b16 %v268, %v267
    %v283 = vpack.c.b16 %v270, %v269
    %v284 = vpack.c.b16 %v272, %v271
    %v285 = vpack.c.b16 %v274, %v273
    %v286 = vpack.c.b16 %v276, %v275
    %v287 = vpack.c.b16 %v278, %v277
    %v288 = vpack.c.b16 %v280, %v279
    %297 = vmatpush.bf16.msra.mxu0 %v288
    %298 = vmatpush.bf16.msra.mxu0 %v287
    %299 = vmatpush.bf16.msra.mxu0 %v286
    %300 = vmatpush.bf16.msra.mxu0 %v285
    %301 = vmatpush.bf16.msra.mxu0 %v284
    %302 = vmatpush.bf16.msra.mxu0 %v283
    %303 = vmatpush.bf16.msra.mxu0 %v282
    %304 = vmatpush.bf16.msra.mxu0 %v281
    %305 = vmatmul.bf16.gmra.mxu0 %v221
    %v306 = vpop.f32.mrf.mxu0
    %v307 = vadd.f32 %v247, %v306
    %v308 = vpop.f32.mrf.mxu0
    %v309 = vadd.f32 %v247, %v308
    %310 = vmatmul.bf16.gmra.mxu0 %v222
    %v311 = vpop.f32.mrf.mxu0
    %v312 = vadd.f32 %v247, %v311
    %v313 = vpop.f32.mrf.mxu0
    %v314 = vadd.f32 %v247, %v313
    %315 = vmatmul.bf16.gmra.mxu0 %v223
    %v316 = vpop.f32.mrf.mxu0
    %v317 = vadd.f32 %v247, %v316
    %v318 = vpop.f32.mrf.mxu0
    %v319 = vadd.f32 %v247, %v318
    %320 = vmatmul.bf16.gmra.mxu0 %v224
    %v321 = vpop.f32.mrf.mxu0
    %v322 = vadd.f32 %v247, %v321
    %v323 = vpop.f32.mrf.mxu0
    %v324 = vadd.f32 %v247, %v323
    %325 = vmatmul.bf16.gmra.mxu0 %v225
    %v326 = vpop.f32.mrf.mxu0
    %v327 = vadd.f32 %v247, %v326
    %v328 = vpop.f32.mrf.mxu0
    %v329 = vadd.f32 %v247, %v328
    %330 = vmatmul.bf16.gmra.mxu0 %v226
    %v331 = vpop.f32.mrf.mxu0
    %v332 = vadd.f32 %v247, %v331
    %v333 = vpop.f32.mrf.mxu0
    %v334 = vadd.f32 %v247, %v333
    %335 = vmatmul.bf16.gmra.mxu0 %v227
    %v336 = vpop.f32.mrf.mxu0
    %v337 = vadd.f32 %v247, %v336
    %v338 = vpop.f32.mrf.mxu0
    %v339 = vadd.f32 %v247, %v338
    %340 = vmatmul.bf16.gmra.mxu0 %v228
    %v341 = vpop.f32.mrf.mxu0
    %v342 = vadd.f32 %v247, %v341
    %v343 = vpop.f32.mrf.mxu0
    %v344 = vadd.f32 %v247, %v343
    %345 = vdwg.mxu0
    %v346 = vmul.f32 %v307, %v157
    %v347 = vmul.f32 %v309, %v158
    %v348 = vmul.f32 %v312, %v159
    %v349 = vmul.f32 %v314, %v160
    %v350 = vmul.f32 %v317, %v161
    %v351 = vmul.f32 %v319, %v162
    %v352 = vmul.f32 %v322, %v163
    %v353 = vmul.f32 %v324, %v164
    %v354 = vmul.f32 %v327, %v165
    %v355 = vmul.f32 %v329, %v166
    %v356 = vmul.f32 %v332, %v167
    %v357 = vmul.f32 %v334, %v168
    %v358 = vmul.f32 %v337, %v169
    %v359 = vmul.f32 %v339, %v170
    %v360 = vmul.f32 %v342, %v171
    %v361 = vmul.f32 %v344, %v172
    %v362 = vlaneseq
    %v363 = vand.u32 %v362, 127
    %vm364 = vcmp.lt.s32.totalorder %v363, 16
    %v365 = vsel %vm364, 1, 0
    %v366 = vcvt.s32.f32 %v365
    %v367 = vmul.f32 %v157, %v366
    %v368 = vmul.f32 %v158, %v366
    %v369 = vmul.f32 %v159, %v366
    %v370 = vmul.f32 %v160, %v366
    %v371 = vmul.f32 %v161, %v366
    %v372 = vmul.f32 %v162, %v366
    %v373 = vmul.f32 %v163, %v366
    %v374 = vmul.f32 %v164, %v366
    %v375 = vmul.f32 %v165, %v366
    %v376 = vmul.f32 %v166, %v366
    %v377 = vmul.f32 %v167, %v366
    %v378 = vmul.f32 %v168, %v366
    %v379 = vmul.f32 %v169, %v366
    %v380 = vmul.f32 %v170, %v366
    %v381 = vmul.f32 %v171, %v366
    %v382 = vmul.f32 %v172, %v366
    %v383 = vadd.f32 %v205, %v206
    %v384 = vadd.f32 %v383, %v207
    %v385 = vadd.f32 %v384, %v208
    %v386 = vadd.f32 %v385, %v209
    %v387 = vadd.f32 %v386, %v210
    %v388 = vadd.f32 %v387, %v211
    %v389 = vadd.f32 %v388, %v212
    %v390 = vadd.f32 %v389, %v213
    %v391 = vadd.f32 %v390, %v214
    %v392 = vadd.f32 %v391, %v215
    %v393 = vadd.f32 %v392, %v216
    %v394 = vadd.f32 %v393, %v217
    %v395 = vadd.f32 %v394, %v218
    %v396 = vadd.f32 %v395, %v219
    %v397 = vadd.f32 %v396, %v220
    %398 = vadd.xlane.f32.xlu0 %v397
    %v399 = vpop.xlane.xlu0 %398
    %v400 = vrot.slane %v399, 4
    %v401 = vadd.f32 %v399, %v400
    %v402 = vrot.slane %v401, 2
    %v403 = vadd.f32 %v401, %v402
    %v404 = vrot.slane %v403, 1
    %v405 = vadd.f32 %v403, %v404
    %s406 = vtos %v405
    %v407 = vrcp.pop 128.0
    %v408 = vmul.f32 128.0, %v407
    %v409 = vsub.f32 1.0, %v408
    %v410 = vmul.f32 %v407, %v409
    %v411 = vadd.f32 %v407, %v410
    %vm412 = vweird.f32 %v407
    %v413 = vsel %vm412, %v407, %v411
    %s414 = vtos %v413
    %s415 = smul.f32 %s406, %s414
    %v416 = vstv %s415
    %v417 = vsub.f32 %v205, %v416
    %v418 = vsub.f32 %v206, %v416
    %v419 = vsub.f32 %v207, %v416
    %v420 = vsub.f32 %v208, %v416
    %v421 = vsub.f32 %v209, %v416
    %v422 = vsub.f32 %v210, %v416
    %v423 = vsub.f32 %v211, %v416
    %v424 = vsub.f32 %v212, %v416
    %v425 = vsub.f32 %v213, %v416
    %v426 = vsub.f32 %v214, %v416
    %v427 = vsub.f32 %v215, %v416
    %v428 = vsub.f32 %v216, %v416
    %v429 = vsub.f32 %v217, %v416
    %v430 = vsub.f32 %v218, %v416
    %v431 = vsub.f32 %v219, %v416
    %v432 = vsub.f32 %v220, %v416
    %v433 = vmul.f32 %v417, %v367
    %v434 = vmul.f32 %v418, %v368
    %v435 = vmul.f32 %v419, %v369
    %v436 = vmul.f32 %v420, %v370
    %v437 = vmul.f32 %v421, %v371
    %v438 = vmul.f32 %v422, %v372
    %v439 = vmul.f32 %v423, %v373
    %v440 = vmul.f32 %v424, %v374
    %v441 = vmul.f32 %v425, %v375
    %v442 = vmul.f32 %v426, %v376
    %v443 = vmul.f32 %v427, %v377
    %v444 = vmul.f32 %v428, %v378
    %v445 = vmul.f32 %v429, %v379
    %v446 = vmul.f32 %v430, %v380
    %v447 = vmul.f32 %v431, %v381
    %v448 = vmul.f32 %v432, %v382
    %v449 = vmul.f32 %v433, %v433
    %v450 = vmul.f32 %v434, %v434
    %v451 = vmul.f32 %v435, %v435
    %v452 = vmul.f32 %v436, %v436
    %v453 = vmul.f32 %v437, %v437
    %v454 = vmul.f32 %v438, %v438
    %v455 = vmul.f32 %v439, %v439
    %v456 = vmul.f32 %v440, %v440
    %v457 = vmul.f32 %v441, %v441
    %v458 = vmul.f32 %v442, %v442
    %v459 = vmul.f32 %v443, %v443
    %v460 = vmul.f32 %v444, %v444
    %v461 = vmul.f32 %v445, %v445
    %v462 = vmul.f32 %v446, %v446
    %v463 = vmul.f32 %v447, %v447
    %v464 = vmul.f32 %v448, %v448
    %v465 = vadd.f32 %v449, %v450
    %v466 = vadd.f32 %v465, %v451
    %v467 = vadd.f32 %v466, %v452
    %v468 = vadd.f32 %v467, %v453
    %v469 = vadd.f32 %v468, %v454
    %v470 = vadd.f32 %v469, %v455
    %v471 = vadd.f32 %v470, %v456
    %v472 = vadd.f32 %v471, %v457
    %v473 = vadd.f32 %v472, %v458
    %v474 = vadd.f32 %v473, %v459
    %v475 = vadd.f32 %v474, %v460
    %v476 = vadd.f32 %v475, %v461
    %v477 = vadd.f32 %v476, %v462
    %v478 = vadd.f32 %v477, %v463
    %v479 = vadd.f32 %v478, %v464
    %480 = vadd.xlane.f32.xlu0 %v479
    %v481 = vpop.xlane.xlu0 %480
    %v482 = vrot.slane %v481, 4
    %v483 = vadd.f32 %v481, %v482
    %v484 = vrot.slane %v483, 2
    %v485 = vadd.f32 %v483, %v484
    %v486 = vrot.slane %v485, 1
    %v487 = vadd.f32 %v485, %v486
    %s488 = vtos %v487
    %v489 = vrcp.pop 127.0
    %v490 = vmul.f32 127.0, %v489
    %v491 = vsub.f32 1.0, %v490
    %v492 = vmul.f32 %v489, %v491
    %v493 = vadd.f32 %v489, %v492
    %vm494 = vweird.f32 %v489
    %v495 = vsel %vm494, %v489, %v493
    %s496 = vtos %v495
    %s497 = smul.f32 %s488, %s496
    %v498 = vstv %s497
    %v499 = vrsqrt.pop %v498
    %v500 = vmul.f32 %v499, %v498
    %v501 = vmul.f32 %v500, %v499
    %v502 = vmul.f32 0.5, %v501
    %v503 = vsub.f32 1.5, %v502
    %v504 = vmul.f32 %v499, %v503
    %vm505 = vweird.f32 %v498
    %vm506 = vweird.f32 %v499
    %vm507 = vmor %vm505, %vm506
    %v508 = vsel %vm507, %v499, %v504
    %s509 = vtos %v508
    %v510 = vstv %s509
    %v511 = vmul.f32 %v433, %v510
    %v512 = vmul.f32 %v434, %v510
    %v513 = vmul.f32 %v435, %v510
    %v514 = vmul.f32 %v436, %v510
    %v515 = vmul.f32 %v437, %v510
    %v516 = vmul.f32 %v438, %v510
    %v517 = vmul.f32 %v439, %v510
    %v518 = vmul.f32 %v440, %v510
    %v519 = vmul.f32 %v441, %v510
    %v520 = vmul.f32 %v442, %v510
    %v521 = vmul.f32 %v443, %v510
    %v522 = vmul.f32 %v444, %v510
    %v523 = vmul.f32 %v445, %v510
    %v524 = vmul.f32 %v446, %v510
    %v525 = vmul.f32 %v447, %v510
    %v526 = vmul.f32 %v448, %v510
    %v527 = vpack.c.bf16 %v512, %v511
    %v528 = vpack.c.bf16 %v514, %v513
    %v529 = vpack.c.bf16 %v516, %v515
    %v530 = vpack.c.bf16 %v518, %v517
    %v531 = vpack.c.bf16 %v520, %v519
    %v532 = vpack.c.bf16 %v522, %v521
    %v533 = vpack.c.bf16 %v524, %v523
    %v534 = vpack.c.bf16 %v526, %v525
    %v535 = vld [vmem:[#allocation7] sm:$0xf]
    %v536 = vld [vmem:[#allocation7 + $0x4] sm:$0xf]
    %v537 = vld [vmem:[#allocation7 + $0x8] sm:$0xf]
    %v538 = vld [vmem:[#allocation7 + $0xc] sm:$0xf]
    %v539 = vld [vmem:[#allocation7 + $0x10] sm:$0xf]
    %v540 = vld [vmem:[#allocation7 + $0x14] sm:$0xf]
    %v541 = vld [vmem:[#allocation7 + $0x18] sm:$0xf]
    %v542 = vld [vmem:[#allocation7 + $0x1c] sm:$0xf]
    %v543 = vld [vmem:[#allocation7 + $0x20] sm:$0xf]
    %v544 = vld [vmem:[#allocation7 + $0x24] sm:$0xf]
    %v545 = vld [vmem:[#allocation7 + $0x28] sm:$0xf]
    %v546 = vld [vmem:[#allocation7 + $0x2c] sm:$0xf]
    %v547 = vld [vmem:[#allocation7 + $0x30] sm:$0xf]
    %v548 = vld [vmem:[#allocation7 + $0x34] sm:$0xf]
    %v549 = vld [vmem:[#allocation7 + $0x38] sm:$0xf]
    %v550 = vld [vmem:[#allocation7 + $0x3c] sm:$0xf]
    %v567 = vunpack.c.l.b16 %v535
    %v568 = vunpack.c.l.b16 %v536
    %v569 = vunpack.c.l.b16 %v537
    %v570 = vunpack.c.l.b16 %v538
    %v571 = vunpack.c.l.b16 %v539
    %v572 = vunpack.c.l.b16 %v540
    %v573 = vunpack.c.l.b16 %v541
    %v574 = vunpack.c.l.b16 %v542
    %v575 = vunpack.c.l.b16 %v543
    %v576 = vunpack.c.l.b16 %v544
    %v577 = vunpack.c.l.b16 %v545
    %v578 = vunpack.c.l.b16 %v546
    %v579 = vunpack.c.l.b16 %v547
    %v580 = vunpack.c.l.b16 %v548
    %v581 = vunpack.c.l.b16 %v549
    %v582 = vunpack.c.l.b16 %v550
    %v583 = vpack.c.b16 %v568, %v567
    %v584 = vpack.c.b16 %v570, %v569
    %v585 = vpack.c.b16 %v572, %v571
    %v586 = vpack.c.b16 %v574, %v573
    %v587 = vpack.c.b16 %v576, %v575
    %v588 = vpack.c.b16 %v578, %v577
    %v589 = vpack.c.b16 %v580, %v579
    %v590 = vpack.c.b16 %v582, %v581
    %599 = vmatpush.bf16.msra.mxu0 %v590
    %600 = vmatpush.bf16.msra.mxu0 %v589
    %601 = vmatpush.bf16.msra.mxu0 %v588
    %602 = vmatpush.bf16.msra.mxu0 %v587
    %603 = vmatpush.bf16.msra.mxu0 %v586
    %604 = vmatpush.bf16.msra.mxu0 %v585
    %605 = vmatpush.bf16.msra.mxu0 %v584
    %606 = vmatpush.bf16.msra.mxu0 %v583
    %607 = vmatmul.bf16.gmra.mxu0 %v527
    %v608 = vpop.f32.mrf.mxu0
    %v609 = vadd.f32 0.0, %v608
    %v610 = vpop.f32.mrf.mxu0
    %v611 = vadd.f32 0.0, %v610
    %612 = vmatmul.bf16.gmra.mxu0 %v528
    %v613 = vpop.f32.mrf.mxu0
    %v614 = vadd.f32 0.0, %v613
    %v615 = vpop.f32.mrf.mxu0
    %v616 = vadd.f32 0.0, %v615
    %617 = vmatmul.bf16.gmra.mxu0 %v529
    %v618 = vpop.f32.mrf.mxu0
    %v619 = vadd.f32 0.0, %v618
    %v620 = vpop.f32.mrf.mxu0
    %v621 = vadd.f32 0.0, %v620
    %622 = vmatmul.bf16.gmra.mxu0 %v530
    %v623 = vpop.f32.mrf.mxu0
    %v624 = vadd.f32 0.0, %v623
    %v625 = vpop.f32.mrf.mxu0
    %v626 = vadd.f32 0.0, %v625
    %627 = vmatmul.bf16.gmra.mxu0 %v531
    %v628 = vpop.f32.mrf.mxu0
    %v629 = vadd.f32 0.0, %v628
    %v630 = vpop.f32.mrf.mxu0
    %v631 = vadd.f32 0.0, %v630
    %632 = vmatmul.bf16.gmra.mxu0 %v532
    %v633 = vpop.f32.mrf.mxu0
    %v634 = vadd.f32 0.0, %v633
    %v635 = vpop.f32.mrf.mxu0
    %v636 = vadd.f32 0.0, %v635
    %637 = vmatmul.bf16.gmra.mxu0 %v533
    %v638 = vpop.f32.mrf.mxu0
    %v639 = vadd.f32 0.0, %v638
    %v640 = vpop.f32.mrf.mxu0
    %v641 = vadd.f32 0.0, %v640
    %642 = vmatmul.bf16.gmra.mxu0 %v534
    %v643 = vpop.f32.mrf.mxu0
    %v644 = vadd.f32 0.0, %v643
    %v645 = vpop.f32.mrf.mxu0
    %v646 = vadd.f32 0.0, %v645
    %647 = vdwg.mxu0
    %649 = vset.pattern.permute.xlu0 0
    %650 = vperm.xlu0 %649, %v189
    %v651 = vpop.permute.xlu0 %650
    %654 = vset.pattern.permute.xlu0 0
    %655 = vperm.xlu0 %654, %v190
    %v656 = vpop.permute.xlu0 %655
    %659 = vset.pattern.permute.xlu0 0
    %660 = vperm.xlu0 %659, %v191
    %v661 = vpop.permute.xlu0 %660
    %664 = vset.pattern.permute.xlu0 0
    %665 = vperm.xlu0 %664, %v192
    %v666 = vpop.permute.xlu0 %665
    %669 = vset.pattern.permute.xlu0 0
    %670 = vperm.xlu0 %669, %v193
    %v671 = vpop.permute.xlu0 %670
    %674 = vset.pattern.permute.xlu0 0
    %675 = vperm.xlu0 %674, %v194
    %v676 = vpop.permute.xlu0 %675
    %679 = vset.pattern.permute.xlu0 0
    %680 = vperm.xlu0 %679, %v195
    %v681 = vpop.permute.xlu0 %680
    %684 = vset.pattern.permute.xlu0 0
    %685 = vperm.xlu0 %684, %v196
    %v686 = vpop.permute.xlu0 %685
    %689 = vset.pattern.permute.xlu0 0
    %690 = vperm.xlu0 %689, %v197
    %v691 = vpop.permute.xlu0 %690
    %694 = vset.pattern.permute.xlu0 0
    %695 = vperm.xlu0 %694, %v198
    %v696 = vpop.permute.xlu0 %695
    %699 = vset.pattern.permute.xlu0 0
    %700 = vperm.xlu0 %699, %v199
    %v701 = vpop.permute.xlu0 %700
    %704 = vset.pattern.permute.xlu0 0
    %705 = vperm.xlu0 %704, %v200
    %v706 = vpop.permute.xlu0 %705
    %709 = vset.pattern.permute.xlu0 0
    %710 = vperm.xlu0 %709, %v201
    %v711 = vpop.permute.xlu0 %710
    %714 = vset.pattern.permute.xlu0 0
    %715 = vperm.xlu0 %714, %v202
    %v716 = vpop.permute.xlu0 %715
    %719 = vset.pattern.permute.xlu0 0
    %720 = vperm.xlu0 %719, %v203
    %v721 = vpop.permute.xlu0 %720
    %724 = vset.pattern.permute.xlu0 0
    %725 = vperm.xlu0 %724, %v204
    %v726 = vpop.permute.xlu0 %725
    %v728 = vmul.f32 %v609, %v651
    %v729 = vmul.f32 %v611, %v656
    %v730 = vmul.f32 %v614, %v661
    %v731 = vmul.f32 %v616, %v666
    %v732 = vmul.f32 %v619, %v671
    %v733 = vmul.f32 %v621, %v676
    %v734 = vmul.f32 %v624, %v681
    %v735 = vmul.f32 %v626, %v686
    %v736 = vmul.f32 %v629, %v691
    %v737 = vmul.f32 %v631, %v696
    %v738 = vmul.f32 %v634, %v701
    %v739 = vmul.f32 %v636, %v706
    %v740 = vmul.f32 %v639, %v711
    %v741 = vmul.f32 %v641, %v716
    %v742 = vmul.f32 %v644, %v721
    %v743 = vmul.f32 %v646, %v726
    %v744 = vpack.c.bf16 %v729, %v728
    %v745 = vpack.c.bf16 %v731, %v730
    %v746 = vpack.c.bf16 %v733, %v732
    %v747 = vpack.c.bf16 %v735, %v734
    %v748 = vpack.c.bf16 %v737, %v736
    %v749 = vpack.c.bf16 %v739, %v738
    %v750 = vpack.c.bf16 %v741, %v740
    %v751 = vpack.c.bf16 %v743, %v742
    %v768 = vunpack.c.l.b16 %v173
    %v769 = vunpack.c.l.b16 %v174
    %v770 = vunpack.c.l.b16 %v175
    %v771 = vunpack.c.l.b16 %v176
    %v772 = vunpack.c.l.b16 %v177
    %v773 = vunpack.c.l.b16 %v178
    %v774 = vunpack.c.l.b16 %v179
    %v775 = vunpack.c.l.b16 %v180
    %v776 = vunpack.c.l.b16 %v181
    %v777 = vunpack.c.l.b16 %v182
    %v778 = vunpack.c.l.b16 %v183
    %v779 = vunpack.c.l.b16 %v184
    %v780 = vunpack.c.l.b16 %v185
    %v781 = vunpack.c.l.b16 %v186
    %v782 = vunpack.c.l.b16 %v187
    %v783 = vunpack.c.l.b16 %v188
    %v784 = vpack.c.b16 %v769, %v768
    %v785 = vpack.c.b16 %v771, %v770
    %v786 = vpack.c.b16 %v773, %v772
    %v787 = vpack.c.b16 %v775, %v774
    %v788 = vpack.c.b16 %v777, %v776
    %v789 = vpack.c.b16 %v779, %v778
    %v790 = vpack.c.b16 %v781, %v780
    %v791 = vpack.c.b16 %v783, %v782
    %800 = vmatpush.bf16.msra.mxu0 %v751
    %801 = vmatpush.bf16.msra.mxu0 %v750
    %802 = vmatpush.bf16.msra.mxu0 %v749
    %803 = vmatpush.bf16.msra.mxu0 %v748
    %804 = vmatpush.bf16.msra.mxu0 %v747
    %805 = vmatpush.bf16.msra.mxu0 %v746
    %806 = vmatpush.bf16.msra.mxu0 %v745
    %807 = vmatpush.bf16.msra.mxu0 %v744
    %808 = vmatmul.bf16.gmra.mxu0 %v784
    %v809 = vpop.f32.mrf.mxu0
    %v810 = vadd.f32 %v728, %v809
    %v811 = vpop.f32.mrf.mxu0
    %v812 = vadd.f32 %v729, %v811
    %813 = vmatmul.bf16.gmra.mxu0 %v785
    %v814 = vpop.f32.mrf.mxu0
    %v815 = vadd.f32 %v730, %v814
    %v816 = vpop.f32.mrf.mxu0
    %v817 = vadd.f32 %v731, %v816
    %818 = vmatmul.bf16.gmra.mxu0 %v786
    %v819 = vpop.f32.mrf.mxu0
    %v820 = vadd.f32 %v732, %v819
    %v821 = vpop.f32.mrf.mxu0
    %v822 = vadd.f32 %v733, %v821
    %823 = vmatmul.bf16.gmra.mxu0 %v787
    %v824 = vpop.f32.mrf.mxu0
    %v825 = vadd.f32 %v734, %v824
    %v826 = vpop.f32.mrf.mxu0
    %v827 = vadd.f32 %v735, %v826
    %828 = vmatmul.bf16.gmra.mxu0 %v788
    %v829 = vpop.f32.mrf.mxu0
    %v830 = vadd.f32 %v736, %v829
    %v831 = vpop.f32.mrf.mxu0
    %v832 = vadd.f32 %v737, %v831
    %833 = vmatmul.bf16.gmra.mxu0 %v789
    %v834 = vpop.f32.mrf.mxu0
    %v835 = vadd.f32 %v738, %v834
    %v836 = vpop.f32.mrf.mxu0
    %v837 = vadd.f32 %v739, %v836
    %838 = vmatmul.bf16.gmra.mxu0 %v790
    %v839 = vpop.f32.mrf.mxu0
    %v840 = vadd.f32 %v740, %v839
    %v841 = vpop.f32.mrf.mxu0
    %v842 = vadd.f32 %v741, %v841
    %843 = vmatmul.bf16.gmra.mxu0 %v791
    %v844 = vpop.f32.mrf.mxu0
    %v845 = vadd.f32 %v742, %v844
    %v846 = vpop.f32.mrf.mxu0
    %v847 = vadd.f32 %v743, %v846
    %848 = vdwg.mxu0
    %v849 = vmul.f32 %v810, %v651
    %v850 = vmul.f32 %v812, %v656
    %v851 = vmul.f32 %v815, %v661
    %v852 = vmul.f32 %v817, %v666
    %v853 = vmul.f32 %v820, %v671
    %v854 = vmul.f32 %v822, %v676
    %v855 = vmul.f32 %v825, %v681
    %v856 = vmul.f32 %v827, %v686
    %v857 = vmul.f32 %v830, %v691
    %v858 = vmul.f32 %v832, %v696
    %v859 = vmul.f32 %v835, %v701
    %v860 = vmul.f32 %v837, %v706
    %v861 = vmul.f32 %v840, %v711
    %v862 = vmul.f32 %v842, %v716
    %v863 = vmul.f32 %v845, %v721
    %v864 = vmul.f32 %v847, %v726
    %v865 = vmax.f32 %v849, 0.0
    %v866 = vmax.f32 %v850, 0.0
    %v867 = vmax.f32 %v851, 0.0
    %v868 = vmax.f32 %v852, 0.0
    %v869 = vmax.f32 %v853, 0.0
    %v870 = vmax.f32 %v854, 0.0
    %v871 = vmax.f32 %v855, 0.0
    %v872 = vmax.f32 %v856, 0.0
    %v873 = vmax.f32 %v857, 0.0
    %v874 = vmax.f32 %v858, 0.0
    %v875 = vmax.f32 %v859, 0.0
    %v876 = vmax.f32 %v860, 0.0
    %v877 = vmax.f32 %v861, 0.0
    %v878 = vmax.f32 %v862, 0.0
    %v879 = vmax.f32 %v863, 0.0
    %v880 = vmax.f32 %v864, 0.0
    %v881 = vadd.f32 %v865, %v346
    %v882 = vadd.f32 %v866, %v347
    %v883 = vadd.f32 %v867, %v348
    %v884 = vadd.f32 %v868, %v349
    %v885 = vadd.f32 %v869, %v350
    %v886 = vadd.f32 %v870, %v351
    %v887 = vadd.f32 %v871, %v352
    %v888 = vadd.f32 %v872, %v353
    %v889 = vadd.f32 %v873, %v354
    %v890 = vadd.f32 %v874, %v355
    %v891 = vadd.f32 %v875, %v356
    %v892 = vadd.f32 %v876, %v357
    %v893 = vadd.f32 %v877, %v358
    %v894 = vadd.f32 %v878, %v359
    %v895 = vadd.f32 %v879, %v360
    %v896 = vadd.f32 %v880, %v361
    %vm897 = vcmp.lt.s32.totalorder %v363, 32
    %v898 = vsel %vm897, 1, 0
    %v899 = vcvt.s32.f32 %v898
    %v900 = vmul.f32 %v157, %v899
    %v901 = vmul.f32 %v158, %v899
    %v902 = vmul.f32 %v159, %v899
    %v903 = vmul.f32 %v160, %v899
    %v904 = vmul.f32 %v161, %v899
    %v905 = vmul.f32 %v162, %v899
    %v906 = vmul.f32 %v163, %v899
    %v907 = vmul.f32 %v164, %v899
    %v908 = vmul.f32 %v165, %v899
    %v909 = vmul.f32 %v166, %v899
    %v910 = vmul.f32 %v167, %v899
    %v911 = vmul.f32 %v168, %v899
    %v912 = vmul.f32 %v169, %v899
    %v913 = vmul.f32 %v170, %v899
    %v914 = vmul.f32 %v171, %v899
    %v915 = vmul.f32 %v172, %v899
    %v916 = vadd.f32 %v881, %v882
    %v917 = vadd.f32 %v916, %v883
    %v918 = vadd.f32 %v917, %v884
    %v919 = vadd.f32 %v918, %v885
    %v920 = vadd.f32 %v919, %v886
    %v921 = vadd.f32 %v920, %v887
    %v922 = vadd.f32 %v921, %v888
    %v923 = vadd.f32 %v922, %v889
    %v924 = vadd.f32 %v923, %v890
    %v925 = vadd.f32 %v924, %v891
    %v926 = vadd.f32 %v925, %v892
    %v927 = vadd.f32 %v926, %v893
    %v928 = vadd.f32 %v927, %v894
    %v929 = vadd.f32 %v928, %v895
    %v930 = vadd.f32 %v929, %v896
    %931 = vadd.xlane.f32.xlu0 %v930
    %v932 = vpop.xlane.xlu0 %931
    %v933 = vrot.slane %v932, 4
    %v934 = vadd.f32 %v932, %v933
    %v935 = vrot.slane %v934, 2
    %v936 = vadd.f32 %v934, %v935
    %v937 = vrot.slane %v936, 1
    %v938 = vadd.f32 %v936, %v937
    %s939 = vtos %v938
    %v940 = vrcp.pop 256.0
    %v941 = vmul.f32 256.0, %v940
    %v942 = vsub.f32 1.0, %v941
    %v943 = vmul.f32 %v940, %v942
    %v944 = vadd.f32 %v940, %v943
    %vm945 = vweird.f32 %v940
    %v946 = vsel %vm945, %v940, %v944
    %s947 = vtos %v946
    %s948 = smul.f32 %s939, %s947
    %v949 = vstv %s948
    %v950 = vsub.f32 %v881, %v949
    %v951 = vsub.f32 %v882, %v949
    %v952 = vsub.f32 %v883, %v949
    %v953 = vsub.f32 %v884, %v949
    %v954 = vsub.f32 %v885, %v949
    %v955 = vsub.f32 %v886, %v949
    %v956 = vsub.f32 %v887, %v949
    %v957 = vsub.f32 %v888, %v949
    %v958 = vsub.f32 %v889, %v949
    %v959 = vsub.f32 %v890, %v949
    %v960 = vsub.f32 %v891, %v949
    %v961 = vsub.f32 %v892, %v949
    %v962 = vsub.f32 %v893, %v949
    %v963 = vsub.f32 %v894, %v949
    %v964 = vsub.f32 %v895, %v949
    %v965 = vsub.f32 %v896, %v949
    %v966 = vmul.f32 %v950, %v900
    %v967 = vmul.f32 %v951, %v901
    %v968 = vmul.f32 %v952, %v902
    %v969 = vmul.f32 %v953, %v903
    %v970 = vmul.f32 %v954, %v904
    %v971 = vmul.f32 %v955, %v905
    %v972 = vmul.f32 %v956, %v906
    %v973 = vmul.f32 %v957, %v907
    %v974 = vmul.f32 %v958, %v908
    %v975 = vmul.f32 %v959, %v909
    %v976 = vmul.f32 %v960, %v910
    %v977 = vmul.f32 %v961, %v911
    %v978 = vmul.f32 %v962, %v912
    %v979 = vmul.f32 %v963, %v913
    %v980 = vmul.f32 %v964, %v914
    %v981 = vmul.f32 %v965, %v915
    %v982 = vmul.f32 %v966, %v966
    %v983 = vmul.f32 %v967, %v967
    %v984 = vmul.f32 %v968, %v968
    %v985 = vmul.f32 %v969, %v969
    %v986 = vmul.f32 %v970, %v970
    %v987 = vmul.f32 %v971, %v971
    %v988 = vmul.f32 %v972, %v972
    %v989 = vmul.f32 %v973, %v973
    %v990 = vmul.f32 %v974, %v974
    %v991 = vmul.f32 %v975, %v975
    %v992 = vmul.f32 %v976, %v976
    %v993 = vmul.f32 %v977, %v977
    %v994 = vmul.f32 %v978, %v978
    %v995 = vmul.f32 %v979, %v979
    %v996 = vmul.f32 %v980, %v980
    %v997 = vmul.f32 %v981, %v981
    %v998 = vadd.f32 %v982, %v983
    %v999 = vadd.f32 %v998, %v984
    %v1000 = vadd.f32 %v999, %v985
    %v1001 = vadd.f32 %v1000, %v986
    %v1002 = vadd.f32 %v1001, %v987
    %v1003 = vadd.f32 %v1002, %v988
    %v1004 = vadd.f32 %v1003, %v989
    %v1005 = vadd.f32 %v1004, %v990
    %v1006 = vadd.f32 %v1005, %v991
    %v1007 = vadd.f32 %v1006, %v992
    %v1008 = vadd.f32 %v1007, %v993
    %v1009 = vadd.f32 %v1008, %v994
    %v1010 = vadd.f32 %v1009, %v995
    %v1011 = vadd.f32 %v1010, %v996
    %v1012 = vadd.f32 %v1011, %v997
    %1013 = vadd.xlane.f32.xlu0 %v1012
    %v1014 = vpop.xlane.xlu0 %1013
    %v1015 = vrot.slane %v1014, 4
    %v1016 = vadd.f32 %v1014, %v1015
    %v1017 = vrot.slane %v1016, 2
    %v1018 = vadd.f32 %v1016, %v1017
    %v1019 = vrot.slane %v1018, 1
    %v1020 = vadd.f32 %v1018, %v1019
    %s1021 = vtos %v1020
    %v1022 = vrcp.pop 255.0
    %v1023 = vmul.f32 255.0, %v1022
    %v1024 = vsub.f32 1.0, %v1023
    %v1025 = vmul.f32 %v1022, %v1024
    %v1026 = vadd.f32 %v1022, %v1025
    %vm1027 = vweird.f32 %v1022
    %v1028 = vsel %vm1027, %v1022, %v1026
    %s1029 = vtos %v1028
    %s1030 = smul.f32 %s1021, %s1029
    %v1031 = vstv %s1030
    %v1032 = vrsqrt.pop %v1031
    %v1033 = vmul.f32 %v1032, %v1031
    %v1034 = vmul.f32 %v1033, %v1032
    %v1035 = vmul.f32 0.5, %v1034
    %v1036 = vsub.f32 1.5, %v1035
    %v1037 = vmul.f32 %v1032, %v1036
    %vm1038 = vweird.f32 %v1031
    %vm1039 = vweird.f32 %v1032
    %vm1040 = vmor %vm1038, %vm1039
    %v1041 = vsel %vm1040, %v1032, %v1037
    %s1042 = vtos %v1041
    %v1043 = vstv %s1042
    %v1044 = vmul.f32 %v966, %v1043
    %v1045 = vmul.f32 %v967, %v1043
    %v1046 = vmul.f32 %v968, %v1043
    %v1047 = vmul.f32 %v969, %v1043
    %v1048 = vmul.f32 %v970, %v1043
    %v1049 = vmul.f32 %v971, %v1043
    %v1050 = vmul.f32 %v972, %v1043
    %v1051 = vmul.f32 %v973, %v1043
    %v1052 = vmul.f32 %v974, %v1043
    %v1053 = vmul.f32 %v975, %v1043
    %v1054 = vmul.f32 %v976, %v1043
    %v1055 = vmul.f32 %v977, %v1043
    %v1056 = vmul.f32 %v978, %v1043
    %v1057 = vmul.f32 %v979, %v1043
    %v1058 = vmul.f32 %v980, %v1043
    %v1059 = vmul.f32 %v981, %v1043
    %v1060 = vpack.c.bf16 %v1045, %v1044
    %v1061 = vpack.c.bf16 %v1047, %v1046
    %v1062 = vpack.c.bf16 %v1049, %v1048
    %v1063 = vpack.c.bf16 %v1051, %v1050
    %v1064 = vpack.c.bf16 %v1053, %v1052
    %v1065 = vpack.c.bf16 %v1055, %v1054
    %v1066 = vpack.c.bf16 %v1057, %v1056
    %v1067 = vpack.c.bf16 %v1059, %v1058
    %v1068 = vld [vmem:[#allocation8] sm:$0xf]
    %v1069 = vld [vmem:[#allocation8 + $0x4] sm:$0xf]
    %v1070 = vld [vmem:[#allocation8 + $0x8] sm:$0xf]
    %v1071 = vld [vmem:[#allocation8 + $0xc] sm:$0xf]
    %v1072 = vld [vmem:[#allocation8 + $0x10] sm:$0xf]
    %v1073 = vld [vmem:[#allocation8 + $0x14] sm:$0xf]
    %v1074 = vld [vmem:[#allocation8 + $0x18] sm:$0xf]
    %v1075 = vld [vmem:[#allocation8 + $0x1c] sm:$0xf]
    %v1076 = vld [vmem:[#allocation8 + $0x20] sm:$0xf]
    %v1077 = vld [vmem:[#allocation8 + $0x24] sm:$0xf]
    %v1078 = vld [vmem:[#allocation8 + $0x28] sm:$0xf]
    %v1079 = vld [vmem:[#allocation8 + $0x2c] sm:$0xf]
    %v1080 = vld [vmem:[#allocation8 + $0x30] sm:$0xf]
    %v1081 = vld [vmem:[#allocation8 + $0x34] sm:$0xf]
    %v1082 = vld [vmem:[#allocation8 + $0x38] sm:$0xf]
    %v1083 = vld [vmem:[#allocation8 + $0x3c] sm:$0xf]
    %v1100 = vunpack.c.l.b16 %v1068
    %v1101 = vunpack.c.l.b16 %v1069
    %v1102 = vunpack.c.l.b16 %v1070
    %v1103 = vunpack.c.l.b16 %v1071
    %v1104 = vunpack.c.l.b16 %v1072
    %v1105 = vunpack.c.l.b16 %v1073
    %v1106 = vunpack.c.l.b16 %v1074
    %v1107 = vunpack.c.l.b16 %v1075
    %v1108 = vunpack.c.l.b16 %v1076
    %v1109 = vunpack.c.l.b16 %v1077
    %v1110 = vunpack.c.l.b16 %v1078
    %v1111 = vunpack.c.l.b16 %v1079
    %v1112 = vunpack.c.l.b16 %v1080
    %v1113 = vunpack.c.l.b16 %v1081
    %v1114 = vunpack.c.l.b16 %v1082
    %v1115 = vunpack.c.l.b16 %v1083
    %v1116 = vpack.c.b16 %v1101, %v1100
    %v1117 = vpack.c.b16 %v1103, %v1102
    %v1118 = vpack.c.b16 %v1105, %v1104
    %v1119 = vpack.c.b16 %v1107, %v1106
    %v1120 = vpack.c.b16 %v1109, %v1108
    %v1121 = vpack.c.b16 %v1111, %v1110
    %v1122 = vpack.c.b16 %v1113, %v1112
    %v1123 = vpack.c.b16 %v1115, %v1114
    %1132 = vmatpush.bf16.msra.mxu0 %v1123
    %1133 = vmatpush.bf16.msra.mxu0 %v1122
    %1134 = vmatpush.bf16.msra.mxu0 %v1121
    %1135 = vmatpush.bf16.msra.mxu0 %v1120
    %1136 = vmatpush.bf16.msra.mxu0 %v1119
    %1137 = vmatpush.bf16.msra.mxu0 %v1118
    %1138 = vmatpush.bf16.msra.mxu0 %v1117
    %1139 = vmatpush.bf16.msra.mxu0 %v1116
    %1140 = vmatmul.bf16.gmra.mxu0 %v1060
    %v1141 = vpop.f32.mrf.mxu0
    %v1142 = vadd.f32 0.0, %v1141
    %v1143 = vpop.f32.mrf.mxu0
    %v1144 = vadd.f32 0.0, %v1143
    %1145 = vmatmul.bf16.gmra.mxu0 %v1061
    %v1146 = vpop.f32.mrf.mxu0
    %v1147 = vadd.f32 0.0, %v1146
    %v1148 = vpop.f32.mrf.mxu0
    %v1149 = vadd.f32 0.0, %v1148
    %1150 = vmatmul.bf16.gmra.mxu0 %v1062
    %v1151 = vpop.f32.mrf.mxu0
    %v1152 = vadd.f32 0.0, %v1151
    %v1153 = vpop.f32.mrf.mxu0
    %v1154 = vadd.f32 0.0, %v1153
    %1155 = vmatmul.bf16.gmra.mxu0 %v1063
    %v1156 = vpop.f32.mrf.mxu0
    %v1157 = vadd.f32 0.0, %v1156
    %v1158 = vpop.f32.mrf.mxu0
    %v1159 = vadd.f32 0.0, %v1158
    %1160 = vmatmul.bf16.gmra.mxu0 %v1064
    %v1161 = vpop.f32.mrf.mxu0
    %v1162 = vadd.f32 0.0, %v1161
    %v1163 = vpop.f32.mrf.mxu0
    %v1164 = vadd.f32 0.0, %v1163
    %1165 = vmatmul.bf16.gmra.mxu0 %v1065
    %v1166 = vpop.f32.mrf.mxu0
    %v1167 = vadd.f32 0.0, %v1166
    %v1168 = vpop.f32.mrf.mxu0
    %v1169 = vadd.f32 0.0, %v1168
    %1170 = vmatmul.bf16.gmra.mxu0 %v1066
    %v1171 = vpop.f32.mrf.mxu0
    %v1172 = vadd.f32 0.0, %v1171
    %v1173 = vpop.f32.mrf.mxu0
    %v1174 = vadd.f32 0.0, %v1173
    %1175 = vmatmul.bf16.gmra.mxu0 %v1067
    %v1176 = vpop.f32.mrf.mxu0
    %v1177 = vadd.f32 0.0, %v1176
    %v1178 = vpop.f32.mrf.mxu0
    %v1179 = vadd.f32 0.0, %v1178
    %1180 = vdwg.mxu0
    %v1181 = vmul.f32 %v1142, %v651
    %v1182 = vmul.f32 %v1144, %v656
    %v1183 = vmul.f32 %v1147, %v661
    %v1184 = vmul.f32 %v1149, %v666
    %v1185 = vmul.f32 %v1152, %v671
    %v1186 = vmul.f32 %v1154, %v676
    %v1187 = vmul.f32 %v1157, %v681
    %v1188 = vmul.f32 %v1159, %v686
    %v1189 = vmul.f32 %v1162, %v691
    %v1190 = vmul.f32 %v1164, %v696
    %v1191 = vmul.f32 %v1167, %v701
    %v1192 = vmul.f32 %v1169, %v706
    %v1193 = vmul.f32 %v1172, %v711
    %v1194 = vmul.f32 %v1174, %v716
    %v1195 = vmul.f32 %v1177, %v721
    %v1196 = vmul.f32 %v1179, %v726
    %v1197 = vpack.c.bf16 %v1182, %v1181
    %v1198 = vpack.c.bf16 %v1184, %v1183
    %v1199 = vpack.c.bf16 %v1186, %v1185
    %v1200 = vpack.c.bf16 %v1188, %v1187
    %v1201 = vpack.c.bf16 %v1190, %v1189
    %v1202 = vpack.c.bf16 %v1192, %v1191
    %v1203 = vpack.c.bf16 %v1194, %v1193
    %v1204 = vpack.c.bf16 %v1196, %v1195
    %1205 = vmatpush.bf16.msra.mxu0 %v1204
    %1206 = vmatpush.bf16.msra.mxu0 %v1203
    %1207 = vmatpush.bf16.msra.mxu0 %v1202
    %1208 = vmatpush.bf16.msra.mxu0 %v1201
    %1209 = vmatpush.bf16.msra.mxu0 %v1200
    %1210 = vmatpush.bf16.msra.mxu0 %v1199
    %1211 = vmatpush.bf16.msra.mxu0 %v1198
    %1212 = vmatpush.bf16.msra.mxu0 %v1197
    %1213 = vmatmul.bf16.gmra.mxu0 %v784
    %v1214 = vpop.f32.mrf.mxu0
    %v1215 = vadd.f32 %v1181, %v1214
    %v1216 = vpop.f32.mrf.mxu0
    %v1217 = vadd.f32 %v1182, %v1216
    %1218 = vmatmul.bf16.gmra.mxu0 %v785
    %v1219 = vpop.f32.mrf.mxu0
    %v1220 = vadd.f32 %v1183, %v1219
    %v1221 = vpop.f32.mrf.mxu0
    %v1222 = vadd.f32 %v1184, %v1221
    %1223 = vmatmul.bf16.gmra.mxu0 %v786
    %v1224 = vpop.f32.mrf.mxu0
    %v1225 = vadd.f32 %v1185, %v1224
    %v1226 = vpop.f32.mrf.mxu0
    %v1227 = vadd.f32 %v1186, %v1226
    %1228 = vmatmul.bf16.gmra.mxu0 %v787
    %v1229 = vpop.f32.mrf.mxu0
    %v1230 = vadd.f32 %v1187, %v1229
    %v1231 = vpop.f32.mrf.mxu0
    %v1232 = vadd.f32 %v1188, %v1231
    %1233 = vmatmul.bf16.gmra.mxu0 %v788
    %v1234 = vpop.f32.mrf.mxu0
    %v1235 = vadd.f32 %v1189, %v1234
    %v1236 = vpop.f32.mrf.mxu0
    %v1237 = vadd.f32 %v1190, %v1236
    %1238 = vmatmul.bf16.gmra.mxu0 %v789
    %v1239 = vpop.f32.mrf.mxu0
    %v1240 = vadd.f32 %v1191, %v1239
    %v1241 = vpop.f32.mrf.mxu0
    %v1242 = vadd.f32 %v1192, %v1241
    %1243 = vmatmul.bf16.gmra.mxu0 %v790
    %v1244 = vpop.f32.mrf.mxu0
    %v1245 = vadd.f32 %v1193, %v1244
    %v1246 = vpop.f32.mrf.mxu0
    %v1247 = vadd.f32 %v1194, %v1246
    %1248 = vmatmul.bf16.gmra.mxu0 %v791
    %v1249 = vpop.f32.mrf.mxu0
    %v1250 = vadd.f32 %v1195, %v1249
    %v1251 = vpop.f32.mrf.mxu0
    %v1252 = vadd.f32 %v1196, %v1251
    %1253 = vdwg.mxu0
    %v1254 = vmul.f32 %v1215, %v651
    %v1255 = vmul.f32 %v1217, %v656
    %v1256 = vmul.f32 %v1220, %v661
    %v1257 = vmul.f32 %v1222, %v666
    %v1258 = vmul.f32 %v1225, %v671
    %v1259 = vmul.f32 %v1227, %v676
    %v1260 = vmul.f32 %v1230, %v681
    %v1261 = vmul.f32 %v1232, %v686
    %v1262 = vmul.f32 %v1235, %v691
    %v1263 = vmul.f32 %v1237, %v696
    %v1264 = vmul.f32 %v1240, %v701
    %v1265 = vmul.f32 %v1242, %v706
    %v1266 = vmul.f32 %v1245, %v711
    %v1267 = vmul.f32 %v1247, %v716
    %v1268 = vmul.f32 %v1250, %v721
    %v1269 = vmul.f32 %v1252, %v726
    %v1270 = vmax.f32 %v1254, 0.0
    %v1271 = vmax.f32 %v1255, 0.0
    %v1272 = vmax.f32 %v1256, 0.0
    %v1273 = vmax.f32 %v1257, 0.0
    %v1274 = vmax.f32 %v1258, 0.0
    %v1275 = vmax.f32 %v1259, 0.0
    %v1276 = vmax.f32 %v1260, 0.0
    %v1277 = vmax.f32 %v1261, 0.0
    %v1278 = vmax.f32 %v1262, 0.0
    %v1279 = vmax.f32 %v1263, 0.0
    %v1280 = vmax.f32 %v1264, 0.0
    %v1281 = vmax.f32 %v1265, 0.0
    %v1282 = vmax.f32 %v1266, 0.0
    %v1283 = vmax.f32 %v1267, 0.0
    %v1284 = vmax.f32 %v1268, 0.0
    %v1285 = vmax.f32 %v1269, 0.0
    %v1286 = vadd.f32 %v1270, %v346
    %v1287 = vadd.f32 %v1271, %v347
    %v1288 = vadd.f32 %v1272, %v348
    %v1289 = vadd.f32 %v1273, %v349
    %v1290 = vadd.f32 %v1274, %v350
    %v1291 = vadd.f32 %v1275, %v351
    %v1292 = vadd.f32 %v1276, %v352
    %v1293 = vadd.f32 %v1277, %v353
    %v1294 = vadd.f32 %v1278, %v354
    %v1295 = vadd.f32 %v1279, %v355
    %v1296 = vadd.f32 %v1280, %v356
    %v1297 = vadd.f32 %v1281, %v357
    %v1298 = vadd.f32 %v1282, %v358
    %v1299 = vadd.f32 %v1283, %v359
    %v1300 = vadd.f32 %v1284, %v360
    %v1301 = vadd.f32 %v1285, %v361
    %v1302 = vadd.f32 %v1286, %v1287
    %v1303 = vadd.f32 %v1302, %v1288
    %v1304 = vadd.f32 %v1303, %v1289
    %v1305 = vadd.f32 %v1304, %v1290
    %v1306 = vadd.f32 %v1305, %v1291
    %v1307 = vadd.f32 %v1306, %v1292
    %v1308 = vadd.f32 %v1307, %v1293
    %v1309 = vadd.f32 %v1308, %v1294
    %v1310 = vadd.f32 %v1309, %v1295
    %v1311 = vadd.f32 %v1310, %v1296
    %v1312 = vadd.f32 %v1311, %v1297
    %v1313 = vadd.f32 %v1312, %v1298
    %v1314 = vadd.f32 %v1313, %v1299
    %v1315 = vadd.f32 %v1314, %v1300
    %v1316 = vadd.f32 %v1315, %v1301
    %1317 = vadd.xlane.f32.xlu0 %v1316
    %v1318 = vpop.xlane.xlu0 %1317
    %v1319 = vrot.slane %v1318, 4
    %v1320 = vadd.f32 %v1318, %v1319
    %v1321 = vrot.slane %v1320, 2
    %v1322 = vadd.f32 %v1320, %v1321
    %v1323 = vrot.slane %v1322, 1
    %v1324 = vadd.f32 %v1322, %v1323
    %s1325 = vtos %v1324
    %v1326 = vrcp.pop 256.0
    %v1327 = vmul.f32 256.0, %v1326
    %v1328 = vsub.f32 1.0, %v1327
    %v1329 = vmul.f32 %v1326, %v1328
    %v1330 = vadd.f32 %v1326, %v1329
    %vm1331 = vweird.f32 %v1326
    %v1332 = vsel %vm1331, %v1326, %v1330
    %s1333 = vtos %v1332
    %s1334 = smul.f32 %s1325, %s1333
    %v1335 = vstv %s1334
    %v1336 = vsub.f32 %v1286, %v1335
    %v1337 = vsub.f32 %v1287, %v1335
    %v1338 = vsub.f32 %v1288, %v1335
    %v1339 = vsub.f32 %v1289, %v1335
    %v1340 = vsub.f32 %v1290, %v1335
    %v1341 = vsub.f32 %v1291, %v1335
    %v1342 = vsub.f32 %v1292, %v1335
    %v1343 = vsub.f32 %v1293, %v1335
    %v1344 = vsub.f32 %v1294, %v1335
    %v1345 = vsub.f32 %v1295, %v1335
    %v1346 = vsub.f32 %v1296, %v1335
    %v1347 = vsub.f32 %v1297, %v1335
    %v1348 = vsub.f32 %v1298, %v1335
    %v1349 = vsub.f32 %v1299, %v1335
    %v1350 = vsub.f32 %v1300, %v1335
    %v1351 = vsub.f32 %v1301, %v1335
    %v1352 = vmul.f32 %v1336, %v900
    %v1353 = vmul.f32 %v1337, %v901
    %v1354 = vmul.f32 %v1338, %v902
    %v1355 = vmul.f32 %v1339, %v903
    %v1356 = vmul.f32 %v1340, %v904
    %v1357 = vmul.f32 %v1341, %v905
    %v1358 = vmul.f32 %v1342, %v906
    %v1359 = vmul.f32 %v1343, %v907
    %v1360 = vmul.f32 %v1344, %v908
    %v1361 = vmul.f32 %v1345, %v909
    %v1362 = vmul.f32 %v1346, %v910
    %v1363 = vmul.f32 %v1347, %v911
    %v1364 = vmul.f32 %v1348, %v912
    %v1365 = vmul.f32 %v1349, %v913
    %v1366 = vmul.f32 %v1350, %v914
    %v1367 = vmul.f32 %v1351, %v915
    %v1368 = vmul.f32 %v1352, %v1352
    %v1369 = vmul.f32 %v1353, %v1353
    %v1370 = vmul.f32 %v1354, %v1354
    %v1371 = vmul.f32 %v1355, %v1355
    %v1372 = vmul.f32 %v1356, %v1356
    %v1373 = vmul.f32 %v1357, %v1357
    %v1374 = vmul.f32 %v1358, %v1358
    %v1375 = vmul.f32 %v1359, %v1359
    %v1376 = vmul.f32 %v1360, %v1360
    %v1377 = vmul.f32 %v1361, %v1361
    %v1378 = vmul.f32 %v1362, %v1362
    %v1379 = vmul.f32 %v1363, %v1363
    %v1380 = vmul.f32 %v1364, %v1364
    %v1381 = vmul.f32 %v1365, %v1365
    %v1382 = vmul.f32 %v1366, %v1366
    %v1383 = vmul.f32 %v1367, %v1367
    %v1384 = vadd.f32 %v1368, %v1369
    %v1385 = vadd.f32 %v1384, %v1370
    %v1386 = vadd.f32 %v1385, %v1371
    %v1387 = vadd.f32 %v1386, %v1372
    %v1388 = vadd.f32 %v1387, %v1373
    %v1389 = vadd.f32 %v1388, %v1374
    %v1390 = vadd.f32 %v1389, %v1375
    %v1391 = vadd.f32 %v1390, %v1376
    %v1392 = vadd.f32 %v1391, %v1377
    %v1393 = vadd.f32 %v1392, %v1378
    %v1394 = vadd.f32 %v1393, %v1379
    %v1395 = vadd.f32 %v1394, %v1380
    %v1396 = vadd.f32 %v1395, %v1381
    %v1397 = vadd.f32 %v1396, %v1382
    %v1398 = vadd.f32 %v1397, %v1383
    %1399 = vadd.xlane.f32.xlu0 %v1398
    %v1400 = vpop.xlane.xlu0 %1399
    %v1401 = vrot.slane %v1400, 4
    %v1402 = vadd.f32 %v1400, %v1401
    %v1403 = vrot.slane %v1402, 2
    %v1404 = vadd.f32 %v1402, %v1403
    %v1405 = vrot.slane %v1404, 1
    %v1406 = vadd.f32 %v1404, %v1405
    %s1407 = vtos %v1406
    %v1408 = vrcp.pop 255.0
    %v1409 = vmul.f32 255.0, %v1408
    %v1410 = vsub.f32 1.0, %v1409
    %v1411 = vmul.f32 %v1408, %v1410
    %v1412 = vadd.f32 %v1408, %v1411
    %vm1413 = vweird.f32 %v1408
    %v1414 = vsel %vm1413, %v1408, %v1412
    %s1415 = vtos %v1414
    %s1416 = smul.f32 %s1407, %s1415
    %v1417 = vstv %s1416
    %v1418 = vrsqrt.pop %v1417
    %v1419 = vmul.f32 %v1418, %v1417
    %v1420 = vmul.f32 %v1419, %v1418
    %v1421 = vmul.f32 0.5, %v1420
    %v1422 = vsub.f32 1.5, %v1421
    %v1423 = vmul.f32 %v1418, %v1422
    %vm1424 = vweird.f32 %v1417
    %vm1425 = vweird.f32 %v1418
    %vm1426 = vmor %vm1424, %vm1425
    %v1427 = vsel %vm1426, %v1418, %v1423
    %s1428 = vtos %v1427
    %v1429 = vstv %s1428
    %v1430 = vmul.f32 %v1352, %v1429
    %v1431 = vmul.f32 %v1353, %v1429
    %v1432 = vmul.f32 %v1354, %v1429
    %v1433 = vmul.f32 %v1355, %v1429
    %v1434 = vmul.f32 %v1356, %v1429
    %v1435 = vmul.f32 %v1357, %v1429
    %v1436 = vmul.f32 %v1358, %v1429
    %v1437 = vmul.f32 %v1359, %v1429
    %v1438 = vmul.f32 %v1360, %v1429
    %v1439 = vmul.f32 %v1361, %v1429
    %v1440 = vmul.f32 %v1362, %v1429
    %v1441 = vmul.f32 %v1363, %v1429
    %v1442 = vmul.f32 %v1364, %v1429
    %v1443 = vmul.f32 %v1365, %v1429
    %v1444 = vmul.f32 %v1366, %v1429
    %v1445 = vmul.f32 %v1367, %v1429
    %v1446 = vpack.c.bf16 %v1431, %v1430
    %v1447 = vpack.c.bf16 %v1433, %v1432
    %v1448 = vpack.c.bf16 %v1435, %v1434
    %v1449 = vpack.c.bf16 %v1437, %v1436
    %v1450 = vpack.c.bf16 %v1439, %v1438
    %v1451 = vpack.c.bf16 %v1441, %v1440
    %v1452 = vpack.c.bf16 %v1443, %v1442
    %v1453 = vpack.c.bf16 %v1445, %v1444
    %v1454 = vld [vmem:[#allocation10] sm:$0xf]
    %v1455 = vld [vmem:[#allocation10 + $0x4] sm:$0xf]
    %v1456 = vld [vmem:[#allocation10 + $0x8] sm:$0xf]
    %v1457 = vld [vmem:[#allocation10 + $0xc] sm:$0xf]
    %v1458 = vld [vmem:[#allocation10 + $0x10] sm:$0xf]
    %v1459 = vld [vmem:[#allocation10 + $0x14] sm:$0xf]
    %v1460 = vld [vmem:[#allocation10 + $0x18] sm:$0xf]
    %v1461 = vld [vmem:[#allocation10 + $0x1c] sm:$0xf]
    %v1462 = vld [vmem:[#allocation10 + $0x20] sm:$0xf]
    %v1463 = vld [vmem:[#allocation10 + $0x24] sm:$0xf]
    %v1464 = vld [vmem:[#allocation10 + $0x28] sm:$0xf]
    %v1465 = vld [vmem:[#allocation10 + $0x2c] sm:$0xf]
    %v1466 = vld [vmem:[#allocation10 + $0x30] sm:$0xf]
    %v1467 = vld [vmem:[#allocation10 + $0x34] sm:$0xf]
    %v1468 = vld [vmem:[#allocation10 + $0x38] sm:$0xf]
    %v1469 = vld [vmem:[#allocation10 + $0x3c] sm:$0xf]
    %v1486 = vunpack.c.l.b16 %v1454
    %v1487 = vunpack.c.l.b16 %v1455
    %v1488 = vunpack.c.l.b16 %v1456
    %v1489 = vunpack.c.l.b16 %v1457
    %v1490 = vunpack.c.l.b16 %v1458
    %v1491 = vunpack.c.l.b16 %v1459
    %v1492 = vunpack.c.l.b16 %v1460
    %v1493 = vunpack.c.l.b16 %v1461
    %v1494 = vunpack.c.l.b16 %v1462
    %v1495 = vunpack.c.l.b16 %v1463
    %v1496 = vunpack.c.l.b16 %v1464
    %v1497 = vunpack.c.l.b16 %v1465
    %v1498 = vunpack.c.l.b16 %v1466
    %v1499 = vunpack.c.l.b16 %v1467
    %v1500 = vunpack.c.l.b16 %v1468
    %v1501 = vunpack.c.l.b16 %v1469
    %v1502 = vpack.c.b16 %v1487, %v1486
    %v1503 = vpack.c.b16 %v1489, %v1488
    %v1504 = vpack.c.b16 %v1491, %v1490
    %v1505 = vpack.c.b16 %v1493, %v1492
    %v1506 = vpack.c.b16 %v1495, %v1494
    %v1507 = vpack.c.b16 %v1497, %v1496
    %v1508 = vpack.c.b16 %v1499, %v1498
    %v1509 = vpack.c.b16 %v1501, %v1500
    %1518 = vmatpush.bf16.msra.mxu0 %v1509
    %1519 = vmatpush.bf16.msra.mxu0 %v1508
    %1520 = vmatpush.bf16.msra.mxu0 %v1507
    %1521 = vmatpush.bf16.msra.mxu0 %v1506
    %1522 = vmatpush.bf16.msra.mxu0 %v1505
    %1523 = vmatpush.bf16.msra.mxu0 %v1504
    %1524 = vmatpush.bf16.msra.mxu0 %v1503
    %1525 = vmatpush.bf16.msra.mxu0 %v1502
    %1526 = vmatmul.bf16.gmra.mxu0 %v1446
    %v1527 = vpop.f32.mrf.mxu0
    %v1528 = vadd.f32 0.0, %v1527
    %v1529 = vpop.f32.mrf.mxu0
    %v1530 = vadd.f32 0.0, %v1529
    %1531 = vmatmul.bf16.gmra.mxu0 %v1447
    %v1532 = vpop.f32.mrf.mxu0
    %v1533 = vadd.f32 0.0, %v1532
    %v1534 = vpop.f32.mrf.mxu0
    %v1535 = vadd.f32 0.0, %v1534
    %1536 = vmatmul.bf16.gmra.mxu0 %v1448
    %v1537 = vpop.f32.mrf.mxu0
    %v1538 = vadd.f32 0.0, %v1537
    %v1539 = vpop.f32.mrf.mxu0
    %v1540 = vadd.f32 0.0, %v1539
    %1541 = vmatmul.bf16.gmra.mxu0 %v1449
    %v1542 = vpop.f32.mrf.mxu0
    %v1543 = vadd.f32 0.0, %v1542
    %v1544 = vpop.f32.mrf.mxu0
    %v1545 = vadd.f32 0.0, %v1544
    %1546 = vmatmul.bf16.gmra.mxu0 %v1450
    %v1547 = vpop.f32.mrf.mxu0
    %v1548 = vadd.f32 0.0, %v1547
    %v1549 = vpop.f32.mrf.mxu0
    %v1550 = vadd.f32 0.0, %v1549
    %1551 = vmatmul.bf16.gmra.mxu0 %v1451
    %v1552 = vpop.f32.mrf.mxu0
    %v1553 = vadd.f32 0.0, %v1552
    %v1554 = vpop.f32.mrf.mxu0
    %v1555 = vadd.f32 0.0, %v1554
    %1556 = vmatmul.bf16.gmra.mxu0 %v1452
    %v1557 = vpop.f32.mrf.mxu0
    %v1558 = vadd.f32 0.0, %v1557
    %v1559 = vpop.f32.mrf.mxu0
    %v1560 = vadd.f32 0.0, %v1559
    %1561 = vmatmul.bf16.gmra.mxu0 %v1453
    %v1562 = vpop.f32.mrf.mxu0
    %v1563 = vadd.f32 0.0, %v1562
    %v1564 = vpop.f32.mrf.mxu0
    %v1565 = vadd.f32 0.0, %v1564
    %1566 = vdwg.mxu0
    %v1567 = vmul.f32 %v1528, %v651
    %v1568 = vmul.f32 %v1530, %v656
    %v1569 = vmul.f32 %v1533, %v661
    %v1570 = vmul.f32 %v1535, %v666
    %v1571 = vmul.f32 %v1538, %v671
    %v1572 = vmul.f32 %v1540, %v676
    %v1573 = vmul.f32 %v1543, %v681
    %v1574 = vmul.f32 %v1545, %v686
    %v1575 = vmul.f32 %v1548, %v691
    %v1576 = vmul.f32 %v1550, %v696
    %v1577 = vmul.f32 %v1553, %v701
    %v1578 = vmul.f32 %v1555, %v706
    %v1579 = vmul.f32 %v1558, %v711
    %v1580 = vmul.f32 %v1560, %v716
    %v1581 = vmul.f32 %v1563, %v721
    %v1582 = vmul.f32 %v1565, %v726
    %v1583 = vpack.c.bf16 %v1568, %v1567
    %v1584 = vpack.c.bf16 %v1570, %v1569
    %v1585 = vpack.c.bf16 %v1572, %v1571
    %v1586 = vpack.c.bf16 %v1574, %v1573
    %v1587 = vpack.c.bf16 %v1576, %v1575
    %v1588 = vpack.c.bf16 %v1578, %v1577
    %v1589 = vpack.c.bf16 %v1580, %v1579
    %v1590 = vpack.c.bf16 %v1582, %v1581
    %1591 = vmatpush.bf16.msra.mxu0 %v1590
    %1592 = vmatpush.bf16.msra.mxu0 %v1589
    %1593 = vmatpush.bf16.msra.mxu0 %v1588
    %1594 = vmatpush.bf16.msra.mxu0 %v1587
    %1595 = vmatpush.bf16.msra.mxu0 %v1586
    %1596 = vmatpush.bf16.msra.mxu0 %v1585
    %1597 = vmatpush.bf16.msra.mxu0 %v1584
    %1598 = vmatpush.bf16.msra.mxu0 %v1583
    %1599 = vmatmul.bf16.gmra.mxu0 %v784
    %v1600 = vpop.f32.mrf.mxu0
    %v1601 = vadd.f32 %v1567, %v1600
    %v1602 = vpop.f32.mrf.mxu0
    %v1603 = vadd.f32 %v1568, %v1602
    %1604 = vmatmul.bf16.gmra.mxu0 %v785
    %v1605 = vpop.f32.mrf.mxu0
    %v1606 = vadd.f32 %v1569, %v1605
    %v1607 = vpop.f32.mrf.mxu0
    %v1608 = vadd.f32 %v1570, %v1607
    %1609 = vmatmul.bf16.gmra.mxu0 %v786
    %v1610 = vpop.f32.mrf.mxu0
    %v1611 = vadd.f32 %v1571, %v1610
    %v1612 = vpop.f32.mrf.mxu0
    %v1613 = vadd.f32 %v1572, %v1612
    %1614 = vmatmul.bf16.gmra.mxu0 %v787
    %v1615 = vpop.f32.mrf.mxu0
    %v1616 = vadd.f32 %v1573, %v1615
    %v1617 = vpop.f32.mrf.mxu0
    %v1618 = vadd.f32 %v1574, %v1617
    %1619 = vmatmul.bf16.gmra.mxu0 %v788
    %v1620 = vpop.f32.mrf.mxu0
    %v1621 = vadd.f32 %v1575, %v1620
    %v1622 = vpop.f32.mrf.mxu0
    %v1623 = vadd.f32 %v1576, %v1622
    %1624 = vmatmul.bf16.gmra.mxu0 %v789
    %v1625 = vpop.f32.mrf.mxu0
    %v1626 = vadd.f32 %v1577, %v1625
    %v1627 = vpop.f32.mrf.mxu0
    %v1628 = vadd.f32 %v1578, %v1627
    %1629 = vmatmul.bf16.gmra.mxu0 %v790
    %v1630 = vpop.f32.mrf.mxu0
    %v1631 = vadd.f32 %v1579, %v1630
    %v1632 = vpop.f32.mrf.mxu0
    %v1633 = vadd.f32 %v1580, %v1632
    %1634 = vmatmul.bf16.gmra.mxu0 %v791
    %v1635 = vpop.f32.mrf.mxu0
    %v1636 = vadd.f32 %v1581, %v1635
    %v1637 = vpop.f32.mrf.mxu0
    %v1638 = vadd.f32 %v1582, %v1637
    %1639 = vdwg.mxu0
    %v1640 = vmul.f32 %v1601, %v651
    %v1641 = vmul.f32 %v1603, %v656
    %v1642 = vmul.f32 %v1606, %v661
    %v1643 = vmul.f32 %v1608, %v666
    %v1644 = vmul.f32 %v1611, %v671
    %v1645 = vmul.f32 %v1613, %v676
    %v1646 = vmul.f32 %v1616, %v681
    %v1647 = vmul.f32 %v1618, %v686
    %v1648 = vmul.f32 %v1621, %v691
    %v1649 = vmul.f32 %v1623, %v696
    %v1650 = vmul.f32 %v1626, %v701
    %v1651 = vmul.f32 %v1628, %v706
    %v1652 = vmul.f32 %v1631, %v711
    %v1653 = vmul.f32 %v1633, %v716
    %v1654 = vmul.f32 %v1636, %v721
    %v1655 = vmul.f32 %v1638, %v726
    %1656 = vst [vmem:[#allocation11] sm:$0xff] %v1640
    %1657 = vst [vmem:[#allocation11 + $0x8] sm:$0xff] %v1641
    %1658 = vst [vmem:[#allocation11 + $0x10] sm:$0xff] %v1642
    %1659 = vst [vmem:[#allocation11 + $0x18] sm:$0xff] %v1643
    %1660 = vst [vmem:[#allocation11 + $0x20] sm:$0xff] %v1644
    %1661 = vst [vmem:[#allocation11 + $0x28] sm:$0xff] %v1645
    %1662 = vst [vmem:[#allocation11 + $0x30] sm:$0xff] %v1646
    %1663 = vst [vmem:[#allocation11 + $0x38] sm:$0xff] %v1647
    %1664 = vst [vmem:[#allocation11 + $0x40] sm:$0xff] %v1648
    %1665 = vst [vmem:[#allocation11 + $0x48] sm:$0xff] %v1649
    %1666 = vst [vmem:[#allocation11 + $0x50] sm:$0xff] %v1650
    %1667 = vst [vmem:[#allocation11 + $0x58] sm:$0xff] %v1651
    %1668 = vst [vmem:[#allocation11 + $0x60] sm:$0xff] %v1652
    %1669 = vst [vmem:[#allocation11 + $0x68] sm:$0xff] %v1653
    %1670 = vst [vmem:[#allocation11 + $0x70] sm:$0xff] %v1654
    %1671 = vst [vmem:[#allocation11 + $0x78] sm:$0xff] %v1655
    // Predicated region
    $region54: #{tpu_custom_call.1} parent=1 // pred_check
      _
    $region55: #{tpu_custom_call.1} parent=1 // pred_check_branch
      %1673 = sbr.rel (0) target = $region57
    $region56: #{tpu_custom_call.1} parent=1 // pred_region
      %1675 = vsyncadd [#allocation4], 0
      %s1676 = sshll.u32 [#allocation11], 4
      %s1677 = int_to_ptr.vmem [resolvable:$true] %s1676
      %s1678 = sshll.u32 %s8, 4
      %s1679 = int_to_ptr.hbm [resolvable:$true] %s1678
      %1684 = dma.vmem_to_hbm [thread:$0]  %s1677, 2048, %s1679, [#allocation4], 128, 128, 8
    $region57: #{tpu_custom_call.1} parent=1 // pred_fallthru
      _
    // Predicated region
    $region58: #{tpu_custom_call.1} parent=1 // pred_check
      _
    $region59: #{tpu_custom_call.1} parent=1 // pred_check_branch
      %1686 = sbr.rel (0) target = $region61
    $region60: #{tpu_custom_call.1} parent=1 // pred_region
      %1688 = dma.done [#allocation4], 2048
    $region61: #{tpu_custom_call.1} parent=1 // pred_fallthru
      _
    %1689 = vsyncpa [#allocation3], 1
    %1690 = vsyncpa [#allocation6], 1
    %1691 = vsyncpa [#allocation9], 1
    %1692 = vsyncpa [#allocation4], 1

</llo_original>
